<compile_context>
chip_gen: v7x
topology: tpu7x:2x2x1
jax: 0.10.0
libtpu: 0.0.40
codegen_flags: <defaults>
</compile_context>

<pallas_src>
import math

import jax
import jax.numpy as jnp
from jax.experimental import pallas as pl
from jax.experimental.pallas import tpu as pltpu  # noqa: F401 (kept for parity)

# ----------------------------- configuration --------------------------------
B, T, C = 2, 16, 32          # batch, seq len, encoder_embed_dim
HEADS = 4
HEAD_DIM = C // HEADS
FFN = 64                      # encoder_ffn_embed_dim
LAYERS = 2                    # encoder_layers
CONV_POS = 8                  # args.conv_pos (even -> SamePad trims last step)
CONV_GROUPS = 4               # args.conv_pos_groups
PAD = CONV_POS // 2
LN_EPS = 1e-5                 # torch.nn.LayerNorm default

BT = B * T                    # 32 rows (batch folded into sublanes)
HBT = HEADS * BT              # 128 attention-score lanes
VEC_W = 3 * C                 # width of the packed bias/LN vector slab (96)


# ------------------------------ math helpers ---------------------------------
def _gelu(x):
    # TODO(synk): torch nn.GELU / activation_fn("gelu") use the exact erf-based
    # GELU; tanh approximation used here (erf lowering not guaranteed in Mosaic).
    c = 0.7978845608028654  # sqrt(2/pi)
    return 0.5 * x * (1.0 + jnp.tanh(c * (x + 0.044715 * x * x * x)))


def _ln(x, g, b):
    mu = jnp.mean(x, axis=-1, keepdims=True)
    var = jnp.mean(jnp.square(x - mu), axis=-1, keepdims=True)
    return (x - mu) * jax.lax.rsqrt(var + LN_EPS) * g + b


# --------------------------- fused encoder kernel ----------------------------
def encoder_kernel(cols_ref, convw_ref, wqkv_ref, w1_ref, wow2_ref, vec_ref,
                   kmask_ref, bbias_ref, vmask_ref, o_ref):
    """Whole TransformerEncoder forward; batch folded into rows: (B*T, C)."""

    def vec(row, width):                     # static slice of the vector slab
        return vec_ref[row:row + 1, :width]  # (1, width)

    # ---- positional conv (pre-built im2col slab) + GELU + residual + LayerNorm
    cols = cols_ref[...]                                 # (BT, K*C) = (32, 256)
    x = cols[:, PAD * C:(PAD + 1) * C]                   # un-padded input (k = PAD block)
    conv = jnp.dot(cols, convw_ref[...],
                   preferred_element_type=jnp.float32) + vec(0, C)
    x = x + _gelu(conv)
    x = _ln(x, vec(1, C), vec(2, C))

    kmask = kmask_ref[...]   # (C, HBT): 1 where channel belongs to column's head
    bbias = bbias_ref[...]   # (BT, HBT): 0 same-batch, -1e9 cross-batch
    vmask = vmask_ref[...]   # (HBT, C) = kmask.T

    # ---- encoder layers (post-norm), statically unrolled ---------------------
    for l in range(LAYERS):
        base = 3 + l * 8
        # fused (and pre-scaled) Q/K/V projection: one lane-dense (BT, 3C) matmul
        qkv = jnp.dot(x, wqkv_ref[l],
                      preferred_element_type=jnp.float32) + vec(base + 0, 3 * C)
        q = qkv[:, :C]                 # HEAD_DIM**-0.5 already folded into wqkv/bqkv
        k = qkv[:, C:2 * C]
        v = qkv[:, 2 * C:]

        # all heads + batches in one lane-dense (BT, 128) score slab
        kbig = jnp.concatenate([k.T] * HEADS, axis=1) * kmask          # (C, HBT)
        s = jnp.dot(q, kbig, preferred_element_type=jnp.float32) + bbias
        # TODO(synk): per-head row max for trained weights; the same-batch global
        # row max is mathematically exact but can underflow a head block if the
        # cross-head score spread exceeds ~80.
        e = jnp.exp(s - jnp.max(s, axis=-1, keepdims=True))

        vbig = jnp.concatenate([v] * HEADS, axis=0) * vmask            # (HBT, C)
        ctx = jnp.dot(e, vbig, preferred_element_type=jnp.float32)     # unnormalized
        den = jnp.dot(e, vmask, preferred_element_type=jnp.float32)    # per-(row, head)
        attn = ctx * pl.reciprocal(den, approx=True)

        y = jnp.dot(attn, wow2_ref[l, :C, :],
                    preferred_element_type=jnp.float32) + vec(base + 1, C)
        x = _ln(x + y, vec(base + 2, C), vec(base + 3, C))

        # FFN
        h = _gelu(jnp.dot(x, w1_ref[l],
                          preferred_element_type=jnp.float32) + vec(base + 4, FFN))
        y = jnp.dot(h, wow2_ref[l, C:, :],
                    preferred_element_type=jnp.float32) + vec(base + 5, C)
        x = _ln(x + y, vec(base + 6, C), vec(base + 7, C))

    o_ref[...] = x


# ----------------------------- parameter setup --------------------------------
def init_params(key):
    keys = iter(jax.random.split(key, 64))

    # pos_conv: torch weight (C_out, C_in/groups, K), normal(0, sqrt(4/(K*C))),
    # bias 0.  weight_norm at init is identity (TODO(synk): apply g*v/||v|| when
    # loading trained checkpoints).  Re-pack into im2col weight W[k*C + c_in, c_out]
    # (block-diagonal across channel groups).
    std_conv = math.sqrt(4.0 / (CONV_POS * C))
    cg = C // CONV_GROUPS
    w_conv = std_conv * jax.random.normal(next(keys), (C, cg, CONV_POS), jnp.float32)
    w_dense = jnp.zeros((CONV_POS, C, C), jnp.float32)
    for g in range(CONV_GROUPS):
        blk = w_conv[g * cg:(g + 1) * cg]                    # (cg_out, cg_in, K)
        w_dense = w_dense.at[:, g * cg:(g + 1) * cg, g * cg:(g + 1) * cg].set(
            jnp.transpose(blk, (2, 1, 0)))                   # -> (K, in, out)
    conv_w = w_dense.reshape(CONV_POS * C, C)                # (K*C, C)

    # init_bert_params: Linear weights ~ N(0, 0.02), biases 0, LayerNorm (1, 0).
    def lin(shape):
        return 0.02 * jax.random.normal(next(keys), shape, jnp.float32)

    wqkv, bqkv, wo, bo, ln1g, ln1b = [], [], [], [], [], []
    w1, b1, w2, b2, ln2g, ln2b = [], [], [], [], [], []
    for _ in range(LAYERS):
        wq, wk, wv = lin((C, C)), lin((C, C)), lin((C, C))
        wqkv.append(jnp.concatenate([wq, wk, wv], axis=1))   # (C, 3C)
        bqkv.append(jnp.zeros((1, 3 * C), jnp.float32))
        wo.append(lin((C, C)));   bo.append(jnp.zeros((1, C), jnp.float32))
        ln1g.append(jnp.ones((1, C), jnp.float32)); ln1b.append(jnp.zeros((1, C), jnp.float32))
        w1.append(lin((C, FFN))); b1.append(jnp.zeros((1, FFN), jnp.float32))
        w2.append(lin((FFN, C))); b2.append(jnp.zeros((1, C), jnp.float32))
        ln2g.append(jnp.ones((1, C), jnp.float32)); ln2b.append(jnp.zeros((1, C), jnp.float32))

    stk = lambda xs: jnp.stack(xs, axis=0)
    return {
        "conv_w": conv_w,
        "conv_b": jnp.zeros((1, C), jnp.float32),
        "ln_g": jnp.ones((1, C), jnp.float32),
        "ln_b": jnp.zeros((1, C), jnp.float32),
        "wqkv": stk(wqkv), "bqkv": stk(bqkv),
        "wo": stk(wo), "bo": stk(bo),
        "ln1_g": stk(ln1g), "ln1_b": stk(ln1b),
        "w1": stk(w1), "b1": stk(b1), "w2": stk(w2), "b2": stk(b2),
        "ln2_g": stk(ln2g), "ln2_b": stk(ln2b),
    }


def pack_params(params):
    """Pack raw params into the few slabs the kernel consumes (one-time cost)."""
    scaling = HEAD_DIM ** -0.5
    qscale = jnp.concatenate([jnp.full((C,), scaling, jnp.float32),
                              jnp.ones((2 * C,), jnp.float32)])
    wqkv = params["wqkv"] * qscale[None, None, :]                 # (L, C, 3C), Q pre-scaled
    bqkv = params["bqkv"] * qscale[None, None, :]                 # (L, 1, 3C)
    wow2 = jnp.concatenate([params["wo"], params["w2"]], axis=1)  # (L, C+FFN, C)

    def pad_to(v, n=VEC_W):
        return jnp.pad(v, ((0, 0), (0, n - v.shape[-1])))

    rows = [pad_to(params["conv_b"]), pad_to(params["ln_g"]), pad_to(params["ln_b"])]
    for l in range(LAYERS):
        rows += [pad_to(bqkv[l]), pad_to(params["bo"][l]),
                 pad_to(params["ln1_g"][l]), pad_to(params["ln1_b"][l]),
                 pad_to(params["b1"][l]), pad_to(params["b2"][l]),
                 pad_to(params["ln2_g"][l]), pad_to(params["ln2_b"][l])]
    vecs = jnp.concatenate(rows, axis=0)                          # (3 + 8*L, 96)

    return {"conv_w": params["conv_w"], "wqkv": wqkv, "w1": params["w1"],
            "wow2": wow2, "vecs": vecs}


# ------------------------------- forward pass ---------------------------------
def transformer_encoder_forward(x, packed, padding_mask=None):
    """Mirrors TransformerEncoder.forward in eval mode (single fused kernel).

    Returns (x, layer_results, extract_result) like the PyTorch module
    (layer=None, extract_layer=None, padding_mask=None, streaming_mask=None).
    """
    # padding_mask is None -> index_put skipped. dropout/layerdrop: eval no-ops.
    # im2col built wrapper-side (lane-dense 256 = 2x128 lanes slab).
    xpad = jnp.pad(x, ((0, 0), (PAD, PAD), (0, 0)))               # SamePad conv padding
    cols = jnp.concatenate([xpad[:, k:k + T, :] for k in range(CONV_POS)], axis=-1)
    cols = cols.reshape(BT, CONV_POS * C)                          # (32, 256)

    # attention masks: columns ordered (head, batch, key_pos) -> 128 lanes exactly
    col = jnp.arange(HBT, dtype=jnp.int32)
    head_of_col = col // BT
    batch_of_col = (col % BT) // T
    head_of_ch = jnp.arange(C, dtype=jnp.int32) // HEAD_DIM
    batch_of_row = jnp.arange(BT, dtype=jnp.int32) // T
    kmask = (head_of_ch[:, None] == head_of_col[None, :]).astype(jnp.float32)   # (C, 128)
    bbias = jnp.where(batch_of_row[:, None] == batch_of_col[None, :],
                      0.0, -1e9).astype(jnp.float32)                            # (32, 128)
    vmask = kmask.T                                                              # (128, C)

    out = pl.pallas_call(
        encoder_kernel,
        out_shape=jax.ShapeDtypeStruct((BT, C), jnp.float32),
    )(cols, packed["conv_w"], packed["wqkv"], packed["w1"], packed["wow2"],
      packed["vecs"], kmask, bbias, vmask)
    return out.reshape(B, T, C), [], None


# --------------------------- plain-JAX reference -------------------------------
def _reference_forward(x, params):
    xpad = jnp.pad(x, ((0, 0), (PAD, PAD), (0, 0)))
    cols = jnp.concatenate([xpad[:, k:k + T, :] for k in range(CONV_POS)], axis=-1)
    conv = jnp.einsum("btk,kc->btc", cols, params["conv_w"]) + params["conv_b"]
    h = x + _gelu(conv)
    h = _ln(h, params["ln_g"], params["ln_b"])
    scaling = HEAD_DIM ** -0.5
    for l in range(LAYERS):
        qkv = jnp.einsum("btc,cd->btd", h, params["wqkv"][l]) + params["bqkv"][l]
        q = (qkv[..., :C] * scaling).reshape(B, T, HEADS, HEAD_DIM)
        k = qkv[..., C:2 * C].reshape(B, T, HEADS, HEAD_DIM)
        v = qkv[..., 2 * C:].reshape(B, T, HEADS, HEAD_DIM)
        s = jnp.einsum("bthd,bshd->bhts", q, k)
        p = jax.nn.softmax(s, axis=-1)
        ctx = jnp.einsum("bhts,bshd->bthd", p, v).reshape(B, T, C)
        y = jnp.einsum("btc,cd->btd", ctx, params["wo"][l]) + params["bo"][l]
        h = _ln(h + y, params["ln1_g"][l], params["ln1_b"][l])
        f = _gelu(jnp.einsum("btc,cf->btf", h, params["w1"][l]) + params["b1"][l])
        y = jnp.einsum("btf,fc->btc", f, params["w2"][l]) + params["b2"][l]
        h = _ln(h + y, params["ln2_g"][l], params["ln2_b"][l])
    return h


# ----------------------------------- main --------------------------------------
if __name__ == "__main__":
    key = jax.random.PRNGKey(0)
    kx, kp = jax.random.split(key)
    x = jax.random.normal(kx, (B, T, C), jnp.float32)
    params = init_params(kp)
    packed = pack_params(params)

    out, layer_results, extract_result = transformer_encoder_forward(x, packed)
    out = jax.block_until_ready(out)
    assert out.shape == (B, T, C)
    assert bool(jnp.all(jnp.isfinite(out)))

    ref = _reference_forward(x, params)
    max_err = float(jnp.max(jnp.abs(out - ref)))
    assert jnp.allclose(out, ref, atol=1e-2, rtol=1e-2), max_err
    print("KERNEL_OK")
</pallas_src>

<mosaic_0001>
module attributes {stable_mosaic.version = 11 : i64} {
  func.func @encoder_kernel(%arg0: memref<32x256xf32, #tpu.memory_space<vmem>>, %arg1: memref<256x32xf32, #tpu.memory_space<vmem>>, %arg2: memref<2x32x96xf32, #tpu.memory_space<vmem>>, %arg3: memref<2x32x64xf32, #tpu.memory_space<vmem>>, %arg4: memref<2x96x32xf32, #tpu.memory_space<vmem>>, %arg5: memref<19x96xf32, #tpu.memory_space<vmem>>, %arg6: memref<32x128xf32, #tpu.memory_space<vmem>>, %arg7: memref<32x128xf32, #tpu.memory_space<vmem>>, %arg8: memref<128x32xf32, #tpu.memory_space<vmem>>, %arg9: memref<32x32xf32, #tpu.memory_space<vmem>>) attributes {dimension_semantics = [], scalar_prefetch = 0 : i64, scratch_operands = 0 : i64, tpu.core_type = #tpu.core_type<tc>} {
    %c0 = arith.constant 0 : index
    %c0_0 = arith.constant 0 : index
    %0 = vector.load %arg0[%c0, %c0_0] : memref<32x256xf32, #tpu.memory_space<vmem>>, vector<32x256xf32>
    %1 = vector.extract_strided_slice %0 {offsets = [0, 128], sizes = [32, 32], strides = [1, 1]} : vector<32x256xf32> to vector<32x32xf32>
    %c0_1 = arith.constant 0 : index
    %c0_2 = arith.constant 0 : index
    %2 = vector.load %arg1[%c0_1, %c0_2] : memref<256x32xf32, #tpu.memory_space<vmem>>, vector<256x32xf32>
    %cst = arith.constant dense<0.000000e+00> : vector<32x32xf32>
    %3 = tpu.matmul %0, %2, %cst {dimension_numbers = #tpu.dot_dimension_numbers<[1], [0], [0], [1], [0, 0, 1, 1], [], []>} : vector<32x256xf32>, vector<256x32xf32>, vector<32x32xf32> -> vector<32x32xf32>
    %c0_3 = arith.constant 0 : index
    %c0_4 = arith.constant 0 : index
    %4 = vector.load %arg5[%c0_3, %c0_4] : memref<19x96xf32, #tpu.memory_space<vmem>>, vector<1x32xf32>
    %5 = vector.broadcast %4 : vector<1x32xf32> to vector<32x32xf32>
    %6 = arith.addf %3, %5 : vector<32x32xf32>
    %cst_5 = arith.constant 5.000000e-01 : f32
    %7 = vector.broadcast %cst_5 : f32 to vector<32x32xf32>
    %8 = arith.mulf %7, %6 : vector<32x32xf32>
    %cst_6 = arith.constant 4.471500e-02 : f32
    %9 = vector.broadcast %cst_6 : f32 to vector<32x32xf32>
    %10 = arith.mulf %9, %6 : vector<32x32xf32>
    %11 = arith.mulf %10, %6 : vector<32x32xf32>
    %12 = arith.mulf %11, %6 : vector<32x32xf32>
    %13 = arith.addf %6, %12 : vector<32x32xf32>
    %cst_7 = arith.constant 0.797884583 : f32
    %14 = vector.broadcast %cst_7 : f32 to vector<32x32xf32>
    %15 = arith.mulf %14, %13 : vector<32x32xf32>
    %16 = math.tanh %15 : vector<32x32xf32>
    %cst_8 = arith.constant 1.000000e+00 : f32
    %17 = vector.broadcast %cst_8 : f32 to vector<32x32xf32>
    %18 = arith.addf %17, %16 : vector<32x32xf32>
    %19 = arith.mulf %8, %18 : vector<32x32xf32>
    %20 = arith.addf %1, %19 : vector<32x32xf32>
    %c1 = arith.constant 1 : index
    %c0_9 = arith.constant 0 : index
    %21 = vector.load %arg5[%c1, %c0_9] : memref<19x96xf32, #tpu.memory_space<vmem>>, vector<1x32xf32>
    %c2 = arith.constant 2 : index
    %c0_10 = arith.constant 0 : index
    %22 = vector.load %arg5[%c2, %c0_10] : memref<19x96xf32, #tpu.memory_space<vmem>>, vector<1x32xf32>
    %cst_11 = arith.constant dense<0.000000e+00> : vector<32xf32>
    %23 = vector.multi_reduction <add>, %20, %cst_11 [1] : vector<32x32xf32> to vector<32xf32>
    %24 = vector.shape_cast %23 : vector<32xf32> to vector<32x1xf32>
    %cst_12 = arith.constant 3.200000e+01 : f32
    %25 = vector.broadcast %cst_12 : f32 to vector<32x1xf32>
    %26 = arith.divf %24, %25 : vector<32x1xf32>
    %27 = vector.broadcast %26 : vector<32x1xf32> to vector<32x32xf32>
    %28 = arith.subf %20, %27 : vector<32x32xf32>
    %29 = arith.mulf %28, %28 : vector<32x32xf32>
    %cst_13 = arith.constant dense<0.000000e+00> : vector<32xf32>
    %30 = vector.multi_reduction <add>, %29, %cst_13 [1] : vector<32x32xf32> to vector<32xf32>
    %31 = vector.shape_cast %30 : vector<32xf32> to vector<32x1xf32>
    %cst_14 = arith.constant 3.200000e+01 : f32
    %32 = vector.broadcast %cst_14 : f32 to vector<32x1xf32>
    %33 = arith.divf %31, %32 : vector<32x1xf32>
    %34 = vector.broadcast %26 : vector<32x1xf32> to vector<32x32xf32>
    %35 = arith.subf %20, %34 : vector<32x32xf32>
    %cst_15 = arith.constant 9.99999974E-6 : f32
    %36 = vector.broadcast %cst_15 : f32 to vector<32x1xf32>
    %37 = arith.addf %33, %36 : vector<32x1xf32>
    %38 = math.rsqrt %37 : vector<32x1xf32>
    %39 = vector.broadcast %38 : vector<32x1xf32> to vector<32x32xf32>
    %40 = arith.mulf %35, %39 : vector<32x32xf32>
    %41 = vector.broadcast %21 : vector<1x32xf32> to vector<32x32xf32>
    %42 = arith.mulf %40, %41 : vector<32x32xf32>
    %43 = vector.broadcast %22 : vector<1x32xf32> to vector<32x32xf32>
    %44 = arith.addf %42, %43 : vector<32x32xf32>
    %c0_16 = arith.constant 0 : index
    %c0_17 = arith.constant 0 : index
    %45 = vector.load %arg6[%c0_16, %c0_17] : memref<32x128xf32, #tpu.memory_space<vmem>>, vector<32x128xf32>
    %c0_18 = arith.constant 0 : index
    %c0_19 = arith.constant 0 : index
    %46 = vector.load %arg7[%c0_18, %c0_19] : memref<32x128xf32, #tpu.memory_space<vmem>>, vector<32x128xf32>
    %c0_20 = arith.constant 0 : index
    %c0_21 = arith.constant 0 : index
    %47 = vector.load %arg8[%c0_20, %c0_21] : memref<128x32xf32, #tpu.memory_space<vmem>>, vector<128x32xf32>
    %c0_22 = arith.constant 0 : index
    %c0_23 = arith.constant 0 : index
    %c0_24 = arith.constant 0 : index
    %48 = vector.load %arg2[%c0_22, %c0_23, %c0_24] : memref<2x32x96xf32, #tpu.memory_space<vmem>>, vector<1x32x96xf32>
    %49 = vector.shape_cast %48 : vector<1x32x96xf32> to vector<32x96xf32>
    %cst_25 = arith.constant dense<0.000000e+00> : vector<32x96xf32>
    %50 = tpu.matmul %44, %49, %cst_25 {dimension_numbers = #tpu.dot_dimension_numbers<[1], [0], [0], [1], [0, 0, 1, 1], [], []>} : vector<32x32xf32>, vector<32x96xf32>, vector<32x96xf32> -> vector<32x96xf32>
    %c3 = arith.constant 3 : index
    %c0_26 = arith.constant 0 : index
    %51 = vector.load %arg5[%c3, %c0_26] : memref<19x96xf32, #tpu.memory_space<vmem>>, vector<1x96xf32>
    %52 = vector.broadcast %51 : vector<1x96xf32> to vector<32x96xf32>
    %53 = arith.addf %50, %52 : vector<32x96xf32>
    %54 = vector.extract_strided_slice %53 {offsets = [0, 0], sizes = [32, 32], strides = [1, 1]} : vector<32x96xf32> to vector<32x32xf32>
    %55 = vector.extract_strided_slice %53 {offsets = [0, 32], sizes = [32, 32], strides = [1, 1]} : vector<32x96xf32> to vector<32x32xf32>
    %56 = vector.extract_strided_slice %53 {offsets = [0, 64], sizes = [32, 32], strides = [1, 1]} : vector<32x96xf32> to vector<32x32xf32>
    %57 = tpu.transpose %55, [1, 0] : vector<32x32xf32> -> vector<32x32xf32>
    %58 = tpu.concatenate %57, %57, %57, %57 in 1 : vector<32x32xf32>, vector<32x32xf32>, vector<32x32xf32>, vector<32x32xf32> -> vector<32x128xf32>
    %59 = arith.mulf %58, %45 : vector<32x128xf32>
    %cst_27 = arith.constant dense<0.000000e+00> : vector<32x128xf32>
    %60 = tpu.matmul %54, %59, %cst_27 {dimension_numbers = #tpu.dot_dimension_numbers<[1], [0], [0], [1], [0, 0, 1, 1], [], []>} : vector<32x32xf32>, vector<32x128xf32>, vector<32x128xf32> -> vector<32x128xf32>
    %61 = arith.addf %60, %46 : vector<32x128xf32>
    %cst_28 = arith.constant dense<0xFF800000> : vector<32xf32>
    %62 = vector.multi_reduction <maximumf>, %61, %cst_28 [1] : vector<32x128xf32> to vector<32xf32>
    %63 = vector.shape_cast %62 : vector<32xf32> to vector<32x1xf32>
    %64 = vector.broadcast %63 : vector<32x1xf32> to vector<32x128xf32>
    %65 = arith.subf %61, %64 : vector<32x128xf32>
    %66 = math.exp %65 : vector<32x128xf32>
    %67 = tpu.concatenate %56, %56, %56, %56 in 0 : vector<32x32xf32>, vector<32x32xf32>, vector<32x32xf32>, vector<32x32xf32> -> vector<128x32xf32>
    %68 = arith.mulf %67, %47 : vector<128x32xf32>
    %cst_29 = arith.constant dense<0.000000e+00> : vector<32x32xf32>
    %69 = tpu.matmul %66, %68, %cst_29 {dimension_numbers = #tpu.dot_dimension_numbers<[1], [0], [0], [1], [0, 0, 1, 1], [], []>} : vector<32x128xf32>, vector<128x32xf32>, vector<32x32xf32> -> vector<32x32xf32>
    %cst_30 = arith.constant dense<0.000000e+00> : vector<32x32xf32>
    %70 = tpu.matmul %66, %47, %cst_30 {dimension_numbers = #tpu.dot_dimension_numbers<[1], [0], [0], [1], [0, 0, 1, 1], [], []>} : vector<32x128xf32>, vector<128x32xf32>, vector<32x32xf32> -> vector<32x32xf32>
    %71 = tpu.reciprocal %70 {approx = true} : vector<32x32xf32> -> vector<32x32xf32>
    %72 = arith.mulf %69, %71 : vector<32x32xf32>
    %c0_31 = arith.constant 0 : index
    %c0_32 = arith.constant 0 : index
    %c0_33 = arith.constant 0 : index
    %73 = vector.load %arg4[%c0_31, %c0_32, %c0_33] : memref<2x96x32xf32, #tpu.memory_space<vmem>>, vector<1x32x32xf32>
    %74 = vector.shape_cast %73 : vector<1x32x32xf32> to vector<32x32xf32>
    %cst_34 = arith.constant dense<0.000000e+00> : vector<32x32xf32>
    %75 = tpu.matmul %72, %74, %cst_34 {dimension_numbers = #tpu.dot_dimension_numbers<[1], [0], [0], [1], [0, 0, 1, 1], [], []>} : vector<32x32xf32>, vector<32x32xf32>, vector<32x32xf32> -> vector<32x32xf32>
    %c4 = arith.constant 4 : index
    %c0_35 = arith.constant 0 : index
    %76 = vector.load %arg5[%c4, %c0_35] : memref<19x96xf32, #tpu.memory_space<vmem>>, vector<1x32xf32>
    %77 = vector.broadcast %76 : vector<1x32xf32> to vector<32x32xf32>
    %78 = arith.addf %75, %77 : vector<32x32xf32>
    %79 = arith.addf %44, %78 : vector<32x32xf32>
    %c5 = arith.constant 5 : index
    %c0_36 = arith.constant 0 : index
    %80 = vector.load %arg5[%c5, %c0_36] : memref<19x96xf32, #tpu.memory_space<vmem>>, vector<1x32xf32>
    %c6 = arith.constant 6 : index
    %c0_37 = arith.constant 0 : index
    %81 = vector.load %arg5[%c6, %c0_37] : memref<19x96xf32, #tpu.memory_space<vmem>>, vector<1x32xf32>
    %cst_38 = arith.constant dense<0.000000e+00> : vector<32xf32>
    %82 = vector.multi_reduction <add>, %79, %cst_38 [1] : vector<32x32xf32> to vector<32xf32>
    %83 = vector.shape_cast %82 : vector<32xf32> to vector<32x1xf32>
    %cst_39 = arith.constant 3.200000e+01 : f32
    %84 = vector.broadcast %cst_39 : f32 to vector<32x1xf32>
    %85 = arith.divf %83, %84 : vector<32x1xf32>
    %86 = vector.broadcast %85 : vector<32x1xf32> to vector<32x32xf32>
    %87 = arith.subf %79, %86 : vector<32x32xf32>
    %88 = arith.mulf %87, %87 : vector<32x32xf32>
    %cst_40 = arith.constant dense<0.000000e+00> : vector<32xf32>
    %89 = vector.multi_reduction <add>, %88, %cst_40 [1] : vector<32x32xf32> to vector<32xf32>
    %90 = vector.shape_cast %89 : vector<32xf32> to vector<32x1xf32>
    %cst_41 = arith.constant 3.200000e+01 : f32
    %91 = vector.broadcast %cst_41 : f32 to vector<32x1xf32>
    %92 = arith.divf %90, %91 : vector<32x1xf32>
    %93 = vector.broadcast %85 : vector<32x1xf32> to vector<32x32xf32>
    %94 = arith.subf %79, %93 : vector<32x32xf32>
    %cst_42 = arith.constant 9.99999974E-6 : f32
    %95 = vector.broadcast %cst_42 : f32 to vector<32x1xf32>
    %96 = arith.addf %92, %95 : vector<32x1xf32>
    %97 = math.rsqrt %96 : vector<32x1xf32>
    %98 = vector.broadcast %97 : vector<32x1xf32> to vector<32x32xf32>
    %99 = arith.mulf %94, %98 : vector<32x32xf32>
    %100 = vector.broadcast %80 : vector<1x32xf32> to vector<32x32xf32>
    %101 = arith.mulf %99, %100 : vector<32x32xf32>
    %102 = vector.broadcast %81 : vector<1x32xf32> to vector<32x32xf32>
    %103 = arith.addf %101, %102 : vector<32x32xf32>
    %c0_43 = arith.constant 0 : index
    %c0_44 = arith.constant 0 : index
    %c0_45 = arith.constant 0 : index
    %104 = vector.load %arg3[%c0_43, %c0_44, %c0_45] : memref<2x32x64xf32, #tpu.memory_space<vmem>>, vector<1x32x64xf32>
    %105 = vector.shape_cast %104 : vector<1x32x64xf32> to vector<32x64xf32>
    %cst_46 = arith.constant dense<0.000000e+00> : vector<32x64xf32>
    %106 = tpu.matmul %103, %105, %cst_46 {dimension_numbers = #tpu.dot_dimension_numbers<[1], [0], [0], [1], [0, 0, 1, 1], [], []>} : vector<32x32xf32>, vector<32x64xf32>, vector<32x64xf32> -> vector<32x64xf32>
    %c7 = arith.constant 7 : index
    %c0_47 = arith.constant 0 : index
    %107 = vector.load %arg5[%c7, %c0_47] : memref<19x96xf32, #tpu.memory_space<vmem>>, vector<1x64xf32>
    %108 = vector.broadcast %107 : vector<1x64xf32> to vector<32x64xf32>
    %109 = arith.addf %106, %108 : vector<32x64xf32>
    %cst_48 = arith.constant 5.000000e-01 : f32
    %110 = vector.broadcast %cst_48 : f32 to vector<32x64xf32>
    %111 = arith.mulf %110, %109 : vector<32x64xf32>
    %cst_49 = arith.constant 4.471500e-02 : f32
    %112 = vector.broadcast %cst_49 : f32 to vector<32x64xf32>
    %113 = arith.mulf %112, %109 : vector<32x64xf32>
    %114 = arith.mulf %113, %109 : vector<32x64xf32>
    %115 = arith.mulf %114, %109 : vector<32x64xf32>
    %116 = arith.addf %109, %115 : vector<32x64xf32>
    %cst_50 = arith.constant 0.797884583 : f32
    %117 = vector.broadcast %cst_50 : f32 to vector<32x64xf32>
    %118 = arith.mulf %117, %116 : vector<32x64xf32>
    %119 = math.tanh %118 : vector<32x64xf32>
    %cst_51 = arith.constant 1.000000e+00 : f32
    %120 = vector.broadcast %cst_51 : f32 to vector<32x64xf32>
    %121 = arith.addf %120, %119 : vector<32x64xf32>
    %122 = arith.mulf %111, %121 : vector<32x64xf32>
    %c0_52 = arith.constant 0 : index
    %c32 = arith.constant 32 : index
    %c0_53 = arith.constant 0 : index
    %123 = vector.load %arg4[%c0_52, %c32, %c0_53] : memref<2x96x32xf32, #tpu.memory_space<vmem>>, vector<1x64x32xf32>
    %124 = vector.shape_cast %123 : vector<1x64x32xf32> to vector<64x32xf32>
    %cst_54 = arith.constant dense<0.000000e+00> : vector<32x32xf32>
    %125 = tpu.matmul %122, %124, %cst_54 {dimension_numbers = #tpu.dot_dimension_numbers<[1], [0], [0], [1], [0, 0, 1, 1], [], []>} : vector<32x64xf32>, vector<64x32xf32>, vector<32x32xf32> -> vector<32x32xf32>
    %c8 = arith.constant 8 : index
    %c0_55 = arith.constant 0 : index
    %126 = vector.load %arg5[%c8, %c0_55] : memref<19x96xf32, #tpu.memory_space<vmem>>, vector<1x32xf32>
    %127 = vector.broadcast %126 : vector<1x32xf32> to vector<32x32xf32>
    %128 = arith.addf %125, %127 : vector<32x32xf32>
    %129 = arith.addf %103, %128 : vector<32x32xf32>
    %c9 = arith.constant 9 : index
    %c0_56 = arith.constant 0 : index
    %130 = vector.load %arg5[%c9, %c0_56] : memref<19x96xf32, #tpu.memory_space<vmem>>, vector<1x32xf32>
    %c10 = arith.constant 10 : index
    %c0_57 = arith.constant 0 : index
    %131 = vector.load %arg5[%c10, %c0_57] : memref<19x96xf32, #tpu.memory_space<vmem>>, vector<1x32xf32>
    %cst_58 = arith.constant dense<0.000000e+00> : vector<32xf32>
    %132 = vector.multi_reduction <add>, %129, %cst_58 [1] : vector<32x32xf32> to vector<32xf32>
    %133 = vector.shape_cast %132 : vector<32xf32> to vector<32x1xf32>
    %cst_59 = arith.constant 3.200000e+01 : f32
    %134 = vector.broadcast %cst_59 : f32 to vector<32x1xf32>
    %135 = arith.divf %133, %134 : vector<32x1xf32>
    %136 = vector.broadcast %135 : vector<32x1xf32> to vector<32x32xf32>
    %137 = arith.subf %129, %136 : vector<32x32xf32>
    %138 = arith.mulf %137, %137 : vector<32x32xf32>
    %cst_60 = arith.constant dense<0.000000e+00> : vector<32xf32>
    %139 = vector.multi_reduction <add>, %138, %cst_60 [1] : vector<32x32xf32> to vector<32xf32>
    %140 = vector.shape_cast %139 : vector<32xf32> to vector<32x1xf32>
    %cst_61 = arith.constant 3.200000e+01 : f32
    %141 = vector.broadcast %cst_61 : f32 to vector<32x1xf32>
    %142 = arith.divf %140, %141 : vector<32x1xf32>
    %143 = vector.broadcast %135 : vector<32x1xf32> to vector<32x32xf32>
    %144 = arith.subf %129, %143 : vector<32x32xf32>
    %cst_62 = arith.constant 9.99999974E-6 : f32
    %145 = vector.broadcast %cst_62 : f32 to vector<32x1xf32>
    %146 = arith.addf %142, %145 : vector<32x1xf32>
    %147 = math.rsqrt %146 : vector<32x1xf32>
    %148 = vector.broadcast %147 : vector<32x1xf32> to vector<32x32xf32>
    %149 = arith.mulf %144, %148 : vector<32x32xf32>
    %150 = vector.broadcast %130 : vector<1x32xf32> to vector<32x32xf32>
    %151 = arith.mulf %149, %150 : vector<32x32xf32>
    %152 = vector.broadcast %131 : vector<1x32xf32> to vector<32x32xf32>
    %153 = arith.addf %151, %152 : vector<32x32xf32>
    %c1_63 = arith.constant 1 : index
    %c0_64 = arith.constant 0 : index
    %c0_65 = arith.constant 0 : index
    %154 = vector.load %arg2[%c1_63, %c0_64, %c0_65] : memref<2x32x96xf32, #tpu.memory_space<vmem>>, vector<1x32x96xf32>
    %155 = vector.shape_cast %154 : vector<1x32x96xf32> to vector<32x96xf32>
    %cst_66 = arith.constant dense<0.000000e+00> : vector<32x96xf32>
    %156 = tpu.matmul %153, %155, %cst_66 {dimension_numbers = #tpu.dot_dimension_numbers<[1], [0], [0], [1], [0, 0, 1, 1], [], []>} : vector<32x32xf32>, vector<32x96xf32>, vector<32x96xf32> -> vector<32x96xf32>
    %c11 = arith.constant 11 : index
    %c0_67 = arith.constant 0 : index
    %157 = vector.load %arg5[%c11, %c0_67] : memref<19x96xf32, #tpu.memory_space<vmem>>, vector<1x96xf32>
    %158 = vector.broadcast %157 : vector<1x96xf32> to vector<32x96xf32>
    %159 = arith.addf %156, %158 : vector<32x96xf32>
    %160 = vector.extract_strided_slice %159 {offsets = [0, 0], sizes = [32, 32], strides = [1, 1]} : vector<32x96xf32> to vector<32x32xf32>
    %161 = vector.extract_strided_slice %159 {offsets = [0, 32], sizes = [32, 32], strides = [1, 1]} : vector<32x96xf32> to vector<32x32xf32>
    %162 = vector.extract_strided_slice %159 {offsets = [0, 64], sizes = [32, 32], strides = [1, 1]} : vector<32x96xf32> to vector<32x32xf32>
    %163 = tpu.transpose %161, [1, 0] : vector<32x32xf32> -> vector<32x32xf32>
    %164 = tpu.concatenate %163, %163, %163, %163 in 1 : vector<32x32xf32>, vector<32x32xf32>, vector<32x32xf32>, vector<32x32xf32> -> vector<32x128xf32>
    %165 = arith.mulf %164, %45 : vector<32x128xf32>
    %cst_68 = arith.constant dense<0.000000e+00> : vector<32x128xf32>
    %166 = tpu.matmul %160, %165, %cst_68 {dimension_numbers = #tpu.dot_dimension_numbers<[1], [0], [0], [1], [0, 0, 1, 1], [], []>} : vector<32x32xf32>, vector<32x128xf32>, vector<32x128xf32> -> vector<32x128xf32>
    %167 = arith.addf %166, %46 : vector<32x128xf32>
    %cst_69 = arith.constant dense<0xFF800000> : vector<32xf32>
    %168 = vector.multi_reduction <maximumf>, %167, %cst_69 [1] : vector<32x128xf32> to vector<32xf32>
    %169 = vector.shape_cast %168 : vector<32xf32> to vector<32x1xf32>
    %170 = vector.broadcast %169 : vector<32x1xf32> to vector<32x128xf32>
    %171 = arith.subf %167, %170 : vector<32x128xf32>
    %172 = math.exp %171 : vector<32x128xf32>
    %173 = tpu.concatenate %162, %162, %162, %162 in 0 : vector<32x32xf32>, vector<32x32xf32>, vector<32x32xf32>, vector<32x32xf32> -> vector<128x32xf32>
    %174 = arith.mulf %173, %47 : vector<128x32xf32>
    %cst_70 = arith.constant dense<0.000000e+00> : vector<32x32xf32>
    %175 = tpu.matmul %172, %174, %cst_70 {dimension_numbers = #tpu.dot_dimension_numbers<[1], [0], [0], [1], [0, 0, 1, 1], [], []>} : vector<32x128xf32>, vector<128x32xf32>, vector<32x32xf32> -> vector<32x32xf32>
    %cst_71 = arith.constant dense<0.000000e+00> : vector<32x32xf32>
    %176 = tpu.matmul %172, %47, %cst_71 {dimension_numbers = #tpu.dot_dimension_numbers<[1], [0], [0], [1], [0, 0, 1, 1], [], []>} : vector<32x128xf32>, vector<128x32xf32>, vector<32x32xf32> -> vector<32x32xf32>
    %177 = tpu.reciprocal %176 {approx = true} : vector<32x32xf32> -> vector<32x32xf32>
    %178 = arith.mulf %175, %177 : vector<32x32xf32>
    %c1_72 = arith.constant 1 : index
    %c0_73 = arith.constant 0 : index
    %c0_74 = arith.constant 0 : index
    %179 = vector.load %arg4[%c1_72, %c0_73, %c0_74] : memref<2x96x32xf32, #tpu.memory_space<vmem>>, vector<1x32x32xf32>
    %180 = vector.shape_cast %179 : vector<1x32x32xf32> to vector<32x32xf32>
    %cst_75 = arith.constant dense<0.000000e+00> : vector<32x32xf32>
    %181 = tpu.matmul %178, %180, %cst_75 {dimension_numbers = #tpu.dot_dimension_numbers<[1], [0], [0], [1], [0, 0, 1, 1], [], []>} : vector<32x32xf32>, vector<32x32xf32>, vector<32x32xf32> -> vector<32x32xf32>
    %c12 = arith.constant 12 : index
    %c0_76 = arith.constant 0 : index
    %182 = vector.load %arg5[%c12, %c0_76] : memref<19x96xf32, #tpu.memory_space<vmem>>, vector<1x32xf32>
    %183 = vector.broadcast %182 : vector<1x32xf32> to vector<32x32xf32>
    %184 = arith.addf %181, %183 : vector<32x32xf32>
    %185 = arith.addf %153, %184 : vector<32x32xf32>
    %c13 = arith.constant 13 : index
    %c0_77 = arith.constant 0 : index
    %186 = vector.load %arg5[%c13, %c0_77] : memref<19x96xf32, #tpu.memory_space<vmem>>, vector<1x32xf32>
    %c14 = arith.constant 14 : index
    %c0_78 = arith.constant 0 : index
    %187 = vector.load %arg5[%c14, %c0_78] : memref<19x96xf32, #tpu.memory_space<vmem>>, vector<1x32xf32>
    %cst_79 = arith.constant dense<0.000000e+00> : vector<32xf32>
    %188 = vector.multi_reduction <add>, %185, %cst_79 [1] : vector<32x32xf32> to vector<32xf32>
    %189 = vector.shape_cast %188 : vector<32xf32> to vector<32x1xf32>
    %cst_80 = arith.constant 3.200000e+01 : f32
    %190 = vector.broadcast %cst_80 : f32 to vector<32x1xf32>
    %191 = arith.divf %189, %190 : vector<32x1xf32>
    %192 = vector.broadcast %191 : vector<32x1xf32> to vector<32x32xf32>
    %193 = arith.subf %185, %192 : vector<32x32xf32>
    %194 = arith.mulf %193, %193 : vector<32x32xf32>
    %cst_81 = arith.constant dense<0.000000e+00> : vector<32xf32>
    %195 = vector.multi_reduction <add>, %194, %cst_81 [1] : vector<32x32xf32> to vector<32xf32>
    %196 = vector.shape_cast %195 : vector<32xf32> to vector<32x1xf32>
    %cst_82 = arith.constant 3.200000e+01 : f32
    %197 = vector.broadcast %cst_82 : f32 to vector<32x1xf32>
    %198 = arith.divf %196, %197 : vector<32x1xf32>
    %199 = vector.broadcast %191 : vector<32x1xf32> to vector<32x32xf32>
    %200 = arith.subf %185, %199 : vector<32x32xf32>
    %cst_83 = arith.constant 9.99999974E-6 : f32
    %201 = vector.broadcast %cst_83 : f32 to vector<32x1xf32>
    %202 = arith.addf %198, %201 : vector<32x1xf32>
    %203 = math.rsqrt %202 : vector<32x1xf32>
    %204 = vector.broadcast %203 : vector<32x1xf32> to vector<32x32xf32>
    %205 = arith.mulf %200, %204 : vector<32x32xf32>
    %206 = vector.broadcast %186 : vector<1x32xf32> to vector<32x32xf32>
    %207 = arith.mulf %205, %206 : vector<32x32xf32>
    %208 = vector.broadcast %187 : vector<1x32xf32> to vector<32x32xf32>
    %209 = arith.addf %207, %208 : vector<32x32xf32>
    %c1_84 = arith.constant 1 : index
    %c0_85 = arith.constant 0 : index
    %c0_86 = arith.constant 0 : index
    %210 = vector.load %arg3[%c1_84, %c0_85, %c0_86] : memref<2x32x64xf32, #tpu.memory_space<vmem>>, vector<1x32x64xf32>
    %211 = vector.shape_cast %210 : vector<1x32x64xf32> to vector<32x64xf32>
    %cst_87 = arith.constant dense<0.000000e+00> : vector<32x64xf32>
    %212 = tpu.matmul %209, %211, %cst_87 {dimension_numbers = #tpu.dot_dimension_numbers<[1], [0], [0], [1], [0, 0, 1, 1], [], []>} : vector<32x32xf32>, vector<32x64xf32>, vector<32x64xf32> -> vector<32x64xf32>
    %c15 = arith.constant 15 : index
    %c0_88 = arith.constant 0 : index
    %213 = vector.load %arg5[%c15, %c0_88] : memref<19x96xf32, #tpu.memory_space<vmem>>, vector<1x64xf32>
    %214 = vector.broadcast %213 : vector<1x64xf32> to vector<32x64xf32>
    %215 = arith.addf %212, %214 : vector<32x64xf32>
    %cst_89 = arith.constant 5.000000e-01 : f32
    %216 = vector.broadcast %cst_89 : f32 to vector<32x64xf32>
    %217 = arith.mulf %216, %215 : vector<32x64xf32>
    %cst_90 = arith.constant 4.471500e-02 : f32
    %218 = vector.broadcast %cst_90 : f32 to vector<32x64xf32>
    %219 = arith.mulf %218, %215 : vector<32x64xf32>
    %220 = arith.mulf %219, %215 : vector<32x64xf32>
    %221 = arith.mulf %220, %215 : vector<32x64xf32>
    %222 = arith.addf %215, %221 : vector<32x64xf32>
    %cst_91 = arith.constant 0.797884583 : f32
    %223 = vector.broadcast %cst_91 : f32 to vector<32x64xf32>
    %224 = arith.mulf %223, %222 : vector<32x64xf32>
    %225 = math.tanh %224 : vector<32x64xf32>
    %cst_92 = arith.constant 1.000000e+00 : f32
    %226 = vector.broadcast %cst_92 : f32 to vector<32x64xf32>
    %227 = arith.addf %226, %225 : vector<32x64xf32>
    %228 = arith.mulf %217, %227 : vector<32x64xf32>
    %c1_93 = arith.constant 1 : index
    %c32_94 = arith.constant 32 : index
    %c0_95 = arith.constant 0 : index
    %229 = vector.load %arg4[%c1_93, %c32_94, %c0_95] : memref<2x96x32xf32, #tpu.memory_space<vmem>>, vector<1x64x32xf32>
    %230 = vector.shape_cast %229 : vector<1x64x32xf32> to vector<64x32xf32>
    %cst_96 = arith.constant dense<0.000000e+00> : vector<32x32xf32>
    %231 = tpu.matmul %228, %230, %cst_96 {dimension_numbers = #tpu.dot_dimension_numbers<[1], [0], [0], [1], [0, 0, 1, 1], [], []>} : vector<32x64xf32>, vector<64x32xf32>, vector<32x32xf32> -> vector<32x32xf32>
    %c16 = arith.constant 16 : index
    %c0_97 = arith.constant 0 : index
    %232 = vector.load %arg5[%c16, %c0_97] : memref<19x96xf32, #tpu.memory_space<vmem>>, vector<1x32xf32>
    %233 = vector.broadcast %232 : vector<1x32xf32> to vector<32x32xf32>
    %234 = arith.addf %231, %233 : vector<32x32xf32>
    %235 = arith.addf %209, %234 : vector<32x32xf32>
    %c17 = arith.constant 17 : index
    %c0_98 = arith.constant 0 : index
    %236 = vector.load %arg5[%c17, %c0_98] : memref<19x96xf32, #tpu.memory_space<vmem>>, vector<1x32xf32>
    %c18 = arith.constant 18 : index
    %c0_99 = arith.constant 0 : index
    %237 = vector.load %arg5[%c18, %c0_99] : memref<19x96xf32, #tpu.memory_space<vmem>>, vector<1x32xf32>
    %cst_100 = arith.constant dense<0.000000e+00> : vector<32xf32>
    %238 = vector.multi_reduction <add>, %235, %cst_100 [1] : vector<32x32xf32> to vector<32xf32>
    %239 = vector.shape_cast %238 : vector<32xf32> to vector<32x1xf32>
    %cst_101 = arith.constant 3.200000e+01 : f32
    %240 = vector.broadcast %cst_101 : f32 to vector<32x1xf32>
    %241 = arith.divf %239, %240 : vector<32x1xf32>
    %242 = vector.broadcast %241 : vector<32x1xf32> to vector<32x32xf32>
    %243 = arith.subf %235, %242 : vector<32x32xf32>
    %244 = arith.mulf %243, %243 : vector<32x32xf32>
    %cst_102 = arith.constant dense<0.000000e+00> : vector<32xf32>
    %245 = vector.multi_reduction <add>, %244, %cst_102 [1] : vector<32x32xf32> to vector<32xf32>
    %246 = vector.shape_cast %245 : vector<32xf32> to vector<32x1xf32>
    %cst_103 = arith.constant 3.200000e+01 : f32
    %247 = vector.broadcast %cst_103 : f32 to vector<32x1xf32>
    %248 = arith.divf %246, %247 : vector<32x1xf32>
    %249 = vector.broadcast %241 : vector<32x1xf32> to vector<32x32xf32>
    %250 = arith.subf %235, %249 : vector<32x32xf32>
    %cst_104 = arith.constant 9.99999974E-6 : f32
    %251 = vector.broadcast %cst_104 : f32 to vector<32x1xf32>
    %252 = arith.addf %248, %251 : vector<32x1xf32>
    %253 = math.rsqrt %252 : vector<32x1xf32>
    %254 = vector.broadcast %253 : vector<32x1xf32> to vector<32x32xf32>
    %255 = arith.mulf %250, %254 : vector<32x32xf32>
    %256 = vector.broadcast %236 : vector<1x32xf32> to vector<32x32xf32>
    %257 = arith.mulf %255, %256 : vector<32x32xf32>
    %258 = vector.broadcast %237 : vector<1x32xf32> to vector<32x32xf32>
    %259 = arith.addf %257, %258 : vector<32x32xf32>
    %c0_105 = arith.constant 0 : index
    %c0_106 = arith.constant 0 : index
    %260 = vector.load %arg9[%c0_105, %c0_106] : memref<32x32xf32, #tpu.memory_space<vmem>>, vector<32x32xf32>
    tpu.vector_store %arg9[%c0_105, %c0_106], %259 {strides = array<i32>} : memref<32x32xf32, #tpu.memory_space<vmem>>, vector<32x32xf32>,
    return
  }
}

</mosaic_0001>

<llo_original>
// kernel: tpu_custom_call.1
$region0: #{tpu_custom_call.1}
  #allocation0 [shape = 'u32[]', space=smem, size = 0x4, offset = 0x4, fixed_abs, tag = 'smem constant byte address 0x4 - core index']
  #allocation1 [shape = 'u32[144,128]{1,0:T(1,128)}', space=vmem, size = 0x12000, scoped, tag = 'internal scratch']
  %s0 = inlined_call_operand.vmem [shape: f32[32,256], index: 0, kind: input, shape index: {}]
  %s1 = inlined_call_operand.vmem [shape: f32[256,32], index: 1, kind: input, shape index: {}]
  %s2 = inlined_call_operand.vmem [shape: f32[2,32,96], index: 2, kind: input, shape index: {}]
  %s3 = inlined_call_operand.vmem [shape: f32[2,32,64], index: 3, kind: input, shape index: {}]
  %s4 = inlined_call_operand.vmem [shape: f32[2,96,32], index: 4, kind: input, shape index: {}]
  %s5 = inlined_call_operand.vmem [shape: f32[19,96], index: 5, kind: input, shape index: {}]
  %s6 = inlined_call_operand.vmem [shape: f32[32,128], index: 6, kind: input, shape index: {}]
  %s7 = inlined_call_operand.vmem [shape: f32[32,128], index: 7, kind: input, shape index: {}]
  %s8 = inlined_call_operand.vmem [shape: f32[128,32], index: 8, kind: input, shape index: {}]
  %s9 = inlined_call_operand.hbm [shape: f32[32,32], index: 9, kind: output, shape index: {}]
  %s10 = sld [smem:[#allocation0]]
  $region46: #{tpu_custom_call.1} parent=0
    _
  %s12 = ssub.s32 1, %s10
  %s13 = scalar_select 0, %s12, %s10
  $region1: #{tpu_custom_call.1} parent=0
    #allocation2 [shape = 'u8[16384]{0}', space=vmem, size = 0x4000, scoped, tag = 'output window, operand 0, single buffered']
    #allocation3 [shape = 's32[1]{0}', space=sflag, size = 0x4, scoped, tag = 'scoped memory for tpu_custom_call.1']
    %14 = vsyncpa [#allocation3], 0
    // Predicated region
    $region2: #{tpu_custom_call.1} parent=1 // pred_check
      _
    $region3: #{tpu_custom_call.1} parent=1 // pred_check_branch
      %16 = sbr.rel (0) target = $region5
    $region4: #{tpu_custom_call.1} parent=1 // pred_region
      _
    $region5: #{tpu_custom_call.1} parent=1 // pred_fallthru
      _
    // Predicated region
    $region6: #{tpu_custom_call.1} parent=1 // pred_check
      _
    $region7: #{tpu_custom_call.1} parent=1 // pred_check_branch
      %18 = sbr.rel (0) target = $region9
    $region8: #{tpu_custom_call.1} parent=1 // pred_region
      _
    $region9: #{tpu_custom_call.1} parent=1 // pred_fallthru
      _
    // Predicated region
    $region10: #{tpu_custom_call.1} parent=1 // pred_check
      _
    $region11: #{tpu_custom_call.1} parent=1 // pred_check_branch
      %20 = sbr.rel (0) target = $region13
    $region12: #{tpu_custom_call.1} parent=1 // pred_region
      _
    $region13: #{tpu_custom_call.1} parent=1 // pred_fallthru
      _
    // Predicated region
    $region14: #{tpu_custom_call.1} parent=1 // pred_check
      _
    $region15: #{tpu_custom_call.1} parent=1 // pred_check_branch
      %22 = sbr.rel (0) target = $region17
    $region16: #{tpu_custom_call.1} parent=1 // pred_region
      _
    $region17: #{tpu_custom_call.1} parent=1 // pred_fallthru
      _
    // Predicated region
    $region18: #{tpu_custom_call.1} parent=1 // pred_check
      _
    $region19: #{tpu_custom_call.1} parent=1 // pred_check_branch
      %24 = sbr.rel (0) target = $region21
    $region20: #{tpu_custom_call.1} parent=1 // pred_region
      _
    $region21: #{tpu_custom_call.1} parent=1 // pred_fallthru
      _
    // Predicated region
    $region22: #{tpu_custom_call.1} parent=1 // pred_check
      _
    $region23: #{tpu_custom_call.1} parent=1 // pred_check_branch
      %26 = sbr.rel (0) target = $region25
    $region24: #{tpu_custom_call.1} parent=1 // pred_region
      _
    $region25: #{tpu_custom_call.1} parent=1 // pred_fallthru
      _
    // Predicated region
    $region26: #{tpu_custom_call.1} parent=1 // pred_check
      _
    $region27: #{tpu_custom_call.1} parent=1 // pred_check_branch
      %28 = sbr.rel (0) target = $region29
    $region28: #{tpu_custom_call.1} parent=1 // pred_region
      _
    $region29: #{tpu_custom_call.1} parent=1 // pred_fallthru
      _
    // Predicated region
    $region30: #{tpu_custom_call.1} parent=1 // pred_check
      _
    $region31: #{tpu_custom_call.1} parent=1 // pred_check_branch
      %30 = sbr.rel (0) target = $region33
    $region32: #{tpu_custom_call.1} parent=1 // pred_region
      _
    $region33: #{tpu_custom_call.1} parent=1 // pred_fallthru
      _
    // Predicated region
    $region34: #{tpu_custom_call.1} parent=1 // pred_check
      _
    $region35: #{tpu_custom_call.1} parent=1 // pred_check_branch
      %32 = sbr.rel (0) target = $region37
    $region36: #{tpu_custom_call.1} parent=1 // pred_region
      _
    $region37: #{tpu_custom_call.1} parent=1 // pred_fallthru
      _
    %v33 = vld [vmem:[%s0] sm:$0xff]
    %v34 = vld [vmem:[%s0 + $0x8] sm:$0xff]
    %v35 = vld [vmem:[%s0 + $0x10] sm:$0xff]
    %v36 = vld [vmem:[%s0 + $0x18] sm:$0xff]
    %v37 = vld [vmem:[%s0 + $0x20] sm:$0xff]
    %v38 = vld [vmem:[%s0 + $0x28] sm:$0xff]
    %v39 = vld [vmem:[%s0 + $0x30] sm:$0xff]
    %v40 = vld [vmem:[%s0 + $0x38] sm:$0xff]
    %v41 = vld [vmem:[%s1] sm:$0xff]
    %v42 = vld [vmem:[%s1 + $0x8] sm:$0xff]
    %v43 = vld [vmem:[%s1 + $0x10] sm:$0xff]
    %v44 = vld [vmem:[%s1 + $0x18] sm:$0xff]
    %v45 = vld [vmem:[%s1 + $0x20] sm:$0xff]
    %v46 = vld [vmem:[%s1 + $0x28] sm:$0xff]
    %v47 = vld [vmem:[%s1 + $0x30] sm:$0xff]
    %v48 = vld [vmem:[%s1 + $0x38] sm:$0xff]
    %v49 = vld [vmem:[%s1 + $0x40] sm:$0xff]
    %v50 = vld [vmem:[%s1 + $0x48] sm:$0xff]
    %v51 = vld [vmem:[%s1 + $0x50] sm:$0xff]
    %v52 = vld [vmem:[%s1 + $0x58] sm:$0xff]
    %v53 = vld [vmem:[%s1 + $0x60] sm:$0xff]
    %v54 = vld [vmem:[%s1 + $0x68] sm:$0xff]
    %v55 = vld [vmem:[%s1 + $0x70] sm:$0xff]
    %v56 = vld [vmem:[%s1 + $0x78] sm:$0xff]
    %v57 = vld [vmem:[%s1 + $0x80] sm:$0xff]
    %v58 = vld [vmem:[%s1 + $0x88] sm:$0xff]
    %v59 = vld [vmem:[%s1 + $0x90] sm:$0xff]
    %v60 = vld [vmem:[%s1 + $0x98] sm:$0xff]
    %v61 = vld [vmem:[%s1 + $0xa0] sm:$0xff]
    %v62 = vld [vmem:[%s1 + $0xa8] sm:$0xff]
    %v63 = vld [vmem:[%s1 + $0xb0] sm:$0xff]
    %v64 = vld [vmem:[%s1 + $0xb8] sm:$0xff]
    %v65 = vld [vmem:[%s1 + $0xc0] sm:$0xff]
    %v66 = vld [vmem:[%s1 + $0xc8] sm:$0xff]
    %v67 = vld [vmem:[%s1 + $0xd0] sm:$0xff]
    %v68 = vld [vmem:[%s1 + $0xd8] sm:$0xff]
    %v69 = vld [vmem:[%s1 + $0xe0] sm:$0xff]
    %v70 = vld [vmem:[%s1 + $0xe8] sm:$0xff]
    %v71 = vld [vmem:[%s1 + $0xf0] sm:$0xff]
    %v72 = vld [vmem:[%s1 + $0xf8] sm:$0xff]
    %v73 = vld [vmem:[%s5] sm:$0x1]
    %v74 = vlaneseq
    %v75 = vshrl.u32 %v74, 7
    %v76 = vsub.s32 0, %v75
    %v77 = vrot.slane %v73, %v76
    %78 = vmatprep.subr.mxu0 0.0
    %79 = vmatpush1.msra.mxu0 %v41
    %80 = vmatprep.subr.mxu0 0.0
    %81 = vmatpush1.msra.mxu0 %v42
    %82 = vmatprep.subr.mxu0 0.0
    %83 = vmatpush1.msra.mxu0 %v43
    %84 = vmatprep.subr.mxu0 0.0
    %85 = vmatpush1.msra.mxu0 %v44
    %86 = vmatprep.subr.mxu0 0.0
    %87 = vmatpush1.msra.mxu0 %v45
    %88 = vmatprep.subr.mxu0 0.0
    %89 = vmatpush1.msra.mxu0 %v46
    %90 = vmatprep.subr.mxu0 0.0
    %91 = vmatpush1.msra.mxu0 %v47
    %92 = vmatprep.subr.mxu0 0.0
    %93 = vmatpush1.msra.mxu0 %v48
    %94 = vmatprep.subr.mxu0 0.0
    %95 = vmatpush1.msra.mxu0 %v49
    %96 = vmatprep.subr.mxu0 0.0
    %97 = vmatpush1.msra.mxu0 %v50
    %98 = vmatprep.subr.mxu0 0.0
    %99 = vmatpush1.msra.mxu0 %v51
    %100 = vmatprep.subr.mxu0 0.0
    %101 = vmatpush1.msra.mxu0 %v52
    %102 = vmatprep.subr.mxu0 0.0
    %103 = vmatpush1.msra.mxu0 %v53
    %104 = vmatprep.subr.mxu0 0.0
    %105 = vmatpush1.msra.mxu0 %v54
    %106 = vmatprep.subr.mxu0 0.0
    %107 = vmatpush1.msra.mxu0 %v55
    %108 = vmatprep.subr.mxu0 0.0
    %109 = vmatpush1.msra.mxu0 %v56
    %110 = vmatprep.subr.mxu0 0.0
    %111 = vmatpush1.msra.mxu0 %v57
    %112 = vmatprep.subr.mxu0 0.0
    %113 = vmatpush1.msra.mxu0 %v58
    %114 = vmatprep.subr.mxu0 0.0
    %115 = vmatpush1.msra.mxu0 %v59
    %116 = vmatprep.subr.mxu0 0.0
    %117 = vmatpush1.msra.mxu0 %v60
    %118 = vmatprep.subr.mxu0 0.0
    %119 = vmatpush1.msra.mxu0 %v61
    %120 = vmatprep.subr.mxu0 0.0
    %121 = vmatpush1.msra.mxu0 %v62
    %122 = vmatprep.subr.mxu0 0.0
    %123 = vmatpush1.msra.mxu0 %v63
    %124 = vmatprep.subr.mxu0 0.0
    %125 = vmatpush1.msra.mxu0 %v64
    %126 = vmatprep.subr.mxu0 0.0
    %127 = vmatpush1.msra.mxu0 %v65
    %128 = vmatprep.subr.mxu0 0.0
    %129 = vmatpush1.msra.mxu0 %v66
    %130 = vmatprep.subr.mxu0 0.0
    %131 = vmatpush1.msra.mxu0 %v67
    %132 = vmatprep.subr.mxu0 0.0
    %133 = vmatpush1.msra.mxu0 %v68
    %134 = vmatprep.subr.mxu0 0.0
    %135 = vmatpush1.msra.mxu0 %v69
    %136 = vmatprep.subr.mxu0 0.0
    %137 = vmatpush1.msra.mxu0 %v70
    %138 = vmatprep.subr.mxu0 0.0
    %139 = vmatpush1.msra.mxu0 %v71
    %140 = vmatprep.subr.mxu0 0.0
    %141 = vmatpush1.msra.mxu0 %v72
    %142 = vmatprep.mubr.f32.mxu0 %v34
    %143 = vmatmul.mubr.f32.gmra.mrb[0].mxu0 %v33
    %v144 = vpop.f32.mrb[0].mxu0
    %v145 = vadd.f32 %v77, %v144
    %v146 = vpop.f32.mrb[0].mxu0
    %147 = vmatprep.mubr.f32.mxu0 %v36
    %148 = vmatmul.mubr.f32.gmra.mrb[0].mxu0 %v35
    %v149 = vpop.f32.mrb[0].mxu0
    %v150 = vadd.f32 %v77, %v149
    %v151 = vpop.f32.mrb[0].mxu0
    %152 = vmatprep.mubr.f32.mxu0 %v38
    %153 = vmatmul.mubr.f32.gmra.mrb[0].mxu0 %v37
    %v154 = vpop.f32.mrb[0].mxu0
    %v155 = vadd.f32 %v77, %v154
    %v156 = vpop.f32.mrb[0].mxu0
    %157 = vmatprep.mubr.f32.mxu0 %v40
    %158 = vmatmul.mubr.f32.gmra.mrb[0].mxu0 %v39
    %v159 = vpop.f32.mrb[0].mxu0
    %v160 = vadd.f32 %v77, %v159
    %v161 = vpop.f32.mrb[0].mxu0
    %162 = vdwg.mxu0
    %v163 = vmul.f32 %v145, 0.5
    %v164 = vmul.f32 %v150, 0.5
    %v165 = vmul.f32 %v155, 0.5
    %v166 = vmul.f32 %v160, 0.5
    %v167 = vmul.f32 %v145, 0.044715
    %v168 = vmul.f32 %v150, 0.044715
    %v169 = vmul.f32 %v155, 0.044715
    %v170 = vmul.f32 %v160, 0.044715
    %v171 = vmul.f32 %v167, %v145
    %v172 = vmul.f32 %v168, %v150
    %v173 = vmul.f32 %v169, %v155
    %v174 = vmul.f32 %v170, %v160
    %v175 = vmul.f32 %v171, %v145
    %v176 = vmul.f32 %v172, %v150
    %v177 = vmul.f32 %v173, %v155
    %v178 = vmul.f32 %v174, %v160
    %v179 = vadd.f32 %v145, %v175
    %v180 = vadd.f32 %v150, %v176
    %v181 = vadd.f32 %v155, %v177
    %v182 = vadd.f32 %v160, %v178
    %v183 = vmul.f32 %v179, 0.7978846
    %v184 = vmul.f32 %v180, 0.7978846
    %v185 = vmul.f32 %v181, 0.7978846
    %v186 = vmul.f32 %v182, 0.7978846
    %v187 = vtanh.pop %v183
    %v188 = vtanh.pop %v184
    %v189 = vtanh.pop %v185
    %v190 = vtanh.pop %v186
    %v191 = vadd.f32 %v187, 1.0
    %v192 = vadd.f32 %v188, 1.0
    %v193 = vadd.f32 %v189, 1.0
    %v194 = vadd.f32 %v190, 1.0
    %v195 = vmul.f32 %v163, %v191
    %v196 = vmul.f32 %v164, %v192
    %v197 = vmul.f32 %v165, %v193
    %v198 = vmul.f32 %v166, %v194
    %v199 = vadd.f32 %v34, %v195
    %v200 = vadd.f32 %v36, %v196
    %v201 = vadd.f32 %v38, %v197
    %v202 = vadd.f32 %v40, %v198
    %v203 = vld [vmem:[%s5 + $0x1] sm:$0x1]
    %v204 = vld [vmem:[%s5 + $0x2] sm:$0x1]
    %vm205 = vcmask 261120
    %v206 = vsel %vm205, %v199, 0.0
    %207 = vadd.xlane.f32.xlu0 %v206
    %v208 = vpop.xlane.xlu0 %207
    %v209 = vsel %vm205, %v200, 0.0
    %210 = vadd.xlane.f32.xlu0 %v209
    %v211 = vpop.xlane.xlu0 %210
    %v212 = vsel %vm205, %v201, 0.0
    %213 = vadd.xlane.f32.xlu0 %v212
    %v214 = vpop.xlane.xlu0 %213
    %v215 = vsel %vm205, %v202, 0.0
    %216 = vadd.xlane.f32.xlu0 %v215
    %v217 = vpop.xlane.xlu0 %216
    %v218 = vrcp.pop 32.0
    %v219 = vmul.f32 %v208, %v218
    %v220 = vmul.f32 %v211, %v218
    %v221 = vmul.f32 %v214, %v218
    %v222 = vmul.f32 %v217, %v218
    %v223 = vsub.f32 %v199, %v219
    %v224 = vsub.f32 %v200, %v220
    %v225 = vsub.f32 %v201, %v221
    %v226 = vsub.f32 %v202, %v222
    %v227 = vmul.f32 %v223, %v223
    %v228 = vmul.f32 %v224, %v224
    %v229 = vmul.f32 %v225, %v225
    %v230 = vmul.f32 %v226, %v226
    %v231 = vsel %vm205, %v227, 0.0
    %232 = vadd.xlane.f32.xlu0 %v231
    %v233 = vpop.xlane.xlu0 %232
    %v234 = vsel %vm205, %v228, 0.0
    %235 = vadd.xlane.f32.xlu0 %v234
    %v236 = vpop.xlane.xlu0 %235
    %v237 = vsel %vm205, %v229, 0.0
    %238 = vadd.xlane.f32.xlu0 %v237
    %v239 = vpop.xlane.xlu0 %238
    %v240 = vsel %vm205, %v230, 0.0
    %241 = vadd.xlane.f32.xlu0 %v240
    %v242 = vpop.xlane.xlu0 %241
    %v243 = vmul.f32 %v233, %v218
    %v244 = vmul.f32 %v236, %v218
    %v245 = vmul.f32 %v239, %v218
    %v246 = vmul.f32 %v242, %v218
    %v247 = vadd.f32 %v243, 1e-05
    %v248 = vadd.f32 %v244, 1e-05
    %v249 = vadd.f32 %v245, 1e-05
    %v250 = vadd.f32 %v246, 1e-05
    %v251 = vrsqrt.pop %v247
    %v252 = vrsqrt.pop %v248
    %v253 = vrsqrt.pop %v249
    %v254 = vrsqrt.pop %v250
    %v255 = vmul.f32 %v223, %v251
    %v256 = vmul.f32 %v224, %v252
    %v257 = vmul.f32 %v225, %v253
    %v258 = vmul.f32 %v226, %v254
    %v259 = vlaneseq
    %v260 = vshrl.u32 %v259, 7
    %v261 = vsub.s32 0, %v260
    %v262 = vrot.slane %v203, %v261
    %v263 = vmul.f32 %v255, %v262
    %v264 = vmul.f32 %v256, %v262
    %v265 = vmul.f32 %v257, %v262
    %v266 = vmul.f32 %v258, %v262
    %v267 = vlaneseq
    %v268 = vshrl.u32 %v267, 7
    %v269 = vsub.s32 0, %v268
    %v270 = vrot.slane %v204, %v269
    %v271 = vadd.f32 %v263, %v270
    %v272 = vadd.f32 %v264, %v270
    %v273 = vadd.f32 %v265, %v270
    %v274 = vadd.f32 %v266, %v270
    %v275 = vld [vmem:[%s6] sm:$0xff]
    %v276 = vld [vmem:[%s6 + $0x8] sm:$0xff]
    %v277 = vld [vmem:[%s6 + $0x10] sm:$0xff]
    %v278 = vld [vmem:[%s6 + $0x18] sm:$0xff]
    %v279 = vld [vmem:[%s7] sm:$0xff]
    %v280 = vld [vmem:[%s7 + $0x8] sm:$0xff]
    %v281 = vld [vmem:[%s7 + $0x10] sm:$0xff]
    %v282 = vld [vmem:[%s7 + $0x18] sm:$0xff]
    %v283 = vld [vmem:[%s8] sm:$0xff]
    %v284 = vld [vmem:[%s8 + $0x8] sm:$0xff]
    %v285 = vld [vmem:[%s8 + $0x10] sm:$0xff]
    %v286 = vld [vmem:[%s8 + $0x18] sm:$0xff]
    %v287 = vld [vmem:[%s8 + $0x20] sm:$0xff]
    %v288 = vld [vmem:[%s8 + $0x28] sm:$0xff]
    %v289 = vld [vmem:[%s8 + $0x30] sm:$0xff]
    %v290 = vld [vmem:[%s8 + $0x38] sm:$0xff]
    %v291 = vld [vmem:[%s8 + $0x40] sm:$0xff]
    %v292 = vld [vmem:[%s8 + $0x48] sm:$0xff]
    %v293 = vld [vmem:[%s8 + $0x50] sm:$0xff]
    %v294 = vld [vmem:[%s8 + $0x58] sm:$0xff]
    %v295 = vld [vmem:[%s8 + $0x60] sm:$0xff]
    %v296 = vld [vmem:[%s8 + $0x68] sm:$0xff]
    %v297 = vld [vmem:[%s8 + $0x70] sm:$0xff]
    %v298 = vld [vmem:[%s8 + $0x78] sm:$0xff]
    %v299 = vld [vmem:[%s2] sm:$0xff]
    %v300 = vld [vmem:[%s2 + $0x8] sm:$0xff]
    %v301 = vld [vmem:[%s2 + $0x10] sm:$0xff]
    %v302 = vld [vmem:[%s2 + $0x18] sm:$0xff]
    %v303 = vld [vmem:[%s5 + $0x3] sm:$0x1]
    %v304 = vlaneseq
    %v305 = vshrl.u32 %v304, 7
    %v306 = vsub.s32 0, %v305
    %v307 = vrot.slane %v303, %v306
    %v309 = vsel %vm205, %v271, 0
    %v312 = vsel %vm205, %v272, 0
    %v315 = vsel %vm205, %v273, 0
    %v318 = vsel %vm205, %v274, 0
    %320 = vmatprep.subr.mxu0 0.0
    %321 = vmatpush1.msra.mxu0 %v299
    %322 = vmatprep.subr.mxu0 0.0
    %323 = vmatpush1.msra.mxu0 %v300
    %324 = vmatprep.subr.mxu0 0.0
    %325 = vmatpush1.msra.mxu0 %v301
    %326 = vmatprep.subr.mxu0 0.0
    %327 = vmatpush1.msra.mxu0 %v302
    %328 = vmatprep.subr.mxu0 0.0
    %329 = vmatpush1.msra.mxu0 0.0
    %330 = vmatprep.subr.mxu0 0.0
    %331 = vmatpush1.msra.mxu0 0.0
    %332 = vmatprep.subr.mxu0 0.0
    %333 = vmatpush1.msra.mxu0 0.0
    %334 = vmatprep.subr.mxu0 0.0
    %335 = vmatpush1.msra.mxu0 0.0
    %336 = vmatprep.subr.mxu0 0.0
    %337 = vmatpush1.msra.mxu0 0.0
    %338 = vmatprep.subr.mxu0 0.0
    %339 = vmatpush1.msra.mxu0 0.0
    %340 = vmatprep.subr.mxu0 0.0
    %341 = vmatpush1.msra.mxu0 0.0
    %342 = vmatprep.subr.mxu0 0.0
    %343 = vmatpush1.msra.mxu0 0.0
    %344 = vmatprep.subr.mxu0 0.0
    %345 = vmatpush1.msra.mxu0 0.0
    %346 = vmatprep.subr.mxu0 0.0
    %347 = vmatpush1.msra.mxu0 0.0
    %348 = vmatprep.subr.mxu0 0.0
    %349 = vmatpush1.msra.mxu0 0.0
    %350 = vmatprep.subr.mxu0 0.0
    %351 = vmatpush1.msra.mxu0 0.0
    %352 = vmatprep.subr.mxu0 0.0
    %353 = vmatpush1.msra.mxu0 0.0
    %354 = vmatprep.subr.mxu0 0.0
    %355 = vmatpush1.msra.mxu0 0.0
    %356 = vmatprep.subr.mxu0 0.0
    %357 = vmatpush1.msra.mxu0 0.0
    %358 = vmatprep.subr.mxu0 0.0
    %359 = vmatpush1.msra.mxu0 0.0
    %360 = vmatprep.subr.mxu0 0.0
    %361 = vmatpush1.msra.mxu0 0.0
    %362 = vmatprep.subr.mxu0 0.0
    %363 = vmatpush1.msra.mxu0 0.0
    %364 = vmatprep.subr.mxu0 0.0
    %365 = vmatpush1.msra.mxu0 0.0
    %366 = vmatprep.subr.mxu0 0.0
    %367 = vmatpush1.msra.mxu0 0.0
    %368 = vmatprep.subr.mxu0 0.0
    %369 = vmatpush1.msra.mxu0 0.0
    %370 = vmatprep.subr.mxu0 0.0
    %371 = vmatpush1.msra.mxu0 0.0
    %372 = vmatprep.subr.mxu0 0.0
    %373 = vmatpush1.msra.mxu0 0.0
    %374 = vmatprep.subr.mxu0 0.0
    %375 = vmatpush1.msra.mxu0 0.0
    %376 = vmatprep.subr.mxu0 0.0
    %377 = vmatpush1.msra.mxu0 0.0
    %378 = vmatprep.subr.mxu0 0.0
    %379 = vmatpush1.msra.mxu0 0.0
    %380 = vmatprep.subr.mxu0 0.0
    %381 = vmatpush1.msra.mxu0 0.0
    %382 = vmatprep.subr.mxu0 0.0
    %383 = vmatpush1.msra.mxu0 0.0
    %384 = vmatprep.mubr.f32.mxu0 0.0
    %385 = vmatmul.mubr.f32.gmra.mrb[0].mxu0 %v309
    %v386 = vpop.f32.mrb[0].mxu0
    %v387 = vadd.f32 %v307, %v386
    %v388 = vpop.f32.mrb[0].mxu0
    %389 = vmatprep.mubr.f32.mxu0 0.0
    %390 = vmatmul.mubr.f32.gmra.mrb[0].mxu0 %v312
    %v391 = vpop.f32.mrb[0].mxu0
    %v392 = vadd.f32 %v307, %v391
    %v393 = vpop.f32.mrb[0].mxu0
    %394 = vmatprep.mubr.f32.mxu0 0.0
    %395 = vmatmul.mubr.f32.gmra.mrb[0].mxu0 %v315
    %v396 = vpop.f32.mrb[0].mxu0
    %v397 = vadd.f32 %v307, %v396
    %v398 = vpop.f32.mrb[0].mxu0
    %399 = vmatprep.mubr.f32.mxu0 0.0
    %400 = vmatmul.mubr.f32.gmra.mrb[0].mxu0 %v318
    %v401 = vpop.f32.mrb[0].mxu0
    %v402 = vadd.f32 %v307, %v401
    %v403 = vpop.f32.mrb[0].mxu0
    %404 = vdwg.mxu0
    %409 = vrot.lane.b32.xlu0 %v387, 96
    %v410 = vpop.permute.xlu0 %409
    %411 = vrot.lane.b32.xlu0 %v392, 96
    %v412 = vpop.permute.xlu0 %411
    %413 = vrot.lane.b32.xlu0 %v397, 96
    %v414 = vpop.permute.xlu0 %413
    %415 = vrot.lane.b32.xlu0 %v402, 96
    %v416 = vpop.permute.xlu0 %415
    %421 = vxpose.xlu0.b32.start [1/16] %v410, 128
    %422 = vxpose.xlu0.b32.cont [2/16] %v412, 128
    %423 = vxpose.xlu0.b32.cont [3/16] %v414, 128
    %424 = vxpose.xlu0.b32.cont [4/16] %v416, 128
    %425 = vxpose.xlu0.b32.cont [5/16] 0.0, 128
    %426 = vxpose.xlu0.b32.cont [6/16] 0.0, 128
    %427 = vxpose.xlu0.b32.cont [7/16] 0.0, 128
    %428 = vxpose.xlu0.b32.cont [8/16] 0.0, 128
    %429 = vxpose.xlu0.b32.cont [9/16] 0.0, 128
    %430 = vxpose.xlu0.b32.cont [10/16] 0.0, 128
    %431 = vxpose.xlu0.b32.cont [11/16] 0.0, 128
    %432 = vxpose.xlu0.b32.cont [12/16] 0.0, 128
    %433 = vxpose.xlu0.b32.cont [13/16] 0.0, 128
    %434 = vxpose.xlu0.b32.cont [14/16] 0.0, 128
    %435 = vxpose.xlu0.b32.cont [15/16] 0.0, 128
    %436 = vxpose.xlu0.b32.end [16/16] 0.0, 128
    %v437 = vpop.trf.xlu0
    %v438 = vpop.trf.xlu0
    %v439 = vpop.trf.xlu0
    %v440 = vpop.trf.xlu0
    %v441 = vpop.trf.xlu0
    %v442 = vpop.trf.xlu0
    %v443 = vpop.trf.xlu0
    %v444 = vpop.trf.xlu0
    %v445 = vpop.trf.xlu0
    %v446 = vpop.trf.xlu0
    %v447 = vpop.trf.xlu0
    %v448 = vpop.trf.xlu0
    %v449 = vpop.trf.xlu0
    %v450 = vpop.trf.xlu0
    %v451 = vpop.trf.xlu0
    %v452 = vpop.trf.xlu0
    %457 = vrot.lane.b32.xlu0 %v437, 32
    %v458 = vpop.permute.xlu0 %457
    %459 = vrot.lane.b32.xlu0 %v438, 32
    %v460 = vpop.permute.xlu0 %459
    %461 = vrot.lane.b32.xlu0 %v439, 32
    %v462 = vpop.permute.xlu0 %461
    %463 = vrot.lane.b32.xlu0 %v440, 32
    %v464 = vpop.permute.xlu0 %463
    %469 = vrot.lane.b32.xlu0 %v437, 64
    %v470 = vpop.permute.xlu0 %469
    %471 = vrot.lane.b32.xlu0 %v438, 64
    %v472 = vpop.permute.xlu0 %471
    %473 = vrot.lane.b32.xlu0 %v439, 64
    %v474 = vpop.permute.xlu0 %473
    %475 = vrot.lane.b32.xlu0 %v440, 64
    %v476 = vpop.permute.xlu0 %475
    %481 = vrot.lane.b32.xlu0 %v437, 96
    %v482 = vpop.permute.xlu0 %481
    %483 = vrot.lane.b32.xlu0 %v438, 96
    %v484 = vpop.permute.xlu0 %483
    %485 = vrot.lane.b32.xlu0 %v439, 96
    %v486 = vpop.permute.xlu0 %485
    %487 = vrot.lane.b32.xlu0 %v440, 96
    %v488 = vpop.permute.xlu0 %487
    %v493 = vsel %vm205, %v437, %v458
    %v494 = vsel %vm205, %v438, %v460
    %v495 = vsel %vm205, %v439, %v462
    %v496 = vsel %vm205, %v440, %v464
    %vm497 = vcmask 523264
    %v498 = vsel %vm497, %v493, %v470
    %v499 = vsel %vm497, %v494, %v472
    %v500 = vsel %vm497, %v495, %v474
    %v501 = vsel %vm497, %v496, %v476
    %vm502 = vcmask 785408
    %v503 = vsel %vm502, %v498, %v482
    %v504 = vsel %vm502, %v499, %v484
    %v505 = vsel %vm502, %v500, %v486
    %v506 = vsel %vm502, %v501, %v488
    %v507 = vmul.f32 %v503, %v275
    %v508 = vmul.f32 %v504, %v276
    %v509 = vmul.f32 %v505, %v277
    %v510 = vmul.f32 %v506, %v278
    %v511 = vsel %vm205, %v387, 0
    %v513 = vsel %vm205, %v392, 0
    %v515 = vsel %vm205, %v397, 0
    %v517 = vsel %vm205, %v402, 0
    %519 = vmatprep.subr.mxu0 0.0
    %520 = vmatpush1.msra.mxu0 %v507
    %521 = vmatprep.subr.mxu0 0.0
    %522 = vmatpush1.msra.mxu0 %v508
    %523 = vmatprep.subr.mxu0 0.0
    %524 = vmatpush1.msra.mxu0 %v509
    %525 = vmatprep.subr.mxu0 0.0
    %526 = vmatpush1.msra.mxu0 %v510
    %527 = vmatprep.subr.mxu0 0.0
    %528 = vmatpush1.msra.mxu0 0.0
    %529 = vmatprep.subr.mxu0 0.0
    %530 = vmatpush1.msra.mxu0 0.0
    %531 = vmatprep.subr.mxu0 0.0
    %532 = vmatpush1.msra.mxu0 0.0
    %533 = vmatprep.subr.mxu0 0.0
    %534 = vmatpush1.msra.mxu0 0.0
    %535 = vmatprep.subr.mxu0 0.0
    %536 = vmatpush1.msra.mxu0 0.0
    %537 = vmatprep.subr.mxu0 0.0
    %538 = vmatpush1.msra.mxu0 0.0
    %539 = vmatprep.subr.mxu0 0.0
    %540 = vmatpush1.msra.mxu0 0.0
    %541 = vmatprep.subr.mxu0 0.0
    %542 = vmatpush1.msra.mxu0 0.0
    %543 = vmatprep.subr.mxu0 0.0
    %544 = vmatpush1.msra.mxu0 0.0
    %545 = vmatprep.subr.mxu0 0.0
    %546 = vmatpush1.msra.mxu0 0.0
    %547 = vmatprep.subr.mxu0 0.0
    %548 = vmatpush1.msra.mxu0 0.0
    %549 = vmatprep.subr.mxu0 0.0
    %550 = vmatpush1.msra.mxu0 0.0
    %551 = vmatprep.subr.mxu0 0.0
    %552 = vmatpush1.msra.mxu0 0.0
    %553 = vmatprep.subr.mxu0 0.0
    %554 = vmatpush1.msra.mxu0 0.0
    %555 = vmatprep.subr.mxu0 0.0
    %556 = vmatpush1.msra.mxu0 0.0
    %557 = vmatprep.subr.mxu0 0.0
    %558 = vmatpush1.msra.mxu0 0.0
    %559 = vmatprep.subr.mxu0 0.0
    %560 = vmatpush1.msra.mxu0 0.0
    %561 = vmatprep.subr.mxu0 0.0
    %562 = vmatpush1.msra.mxu0 0.0
    %563 = vmatprep.subr.mxu0 0.0
    %564 = vmatpush1.msra.mxu0 0.0
    %565 = vmatprep.subr.mxu0 0.0
    %566 = vmatpush1.msra.mxu0 0.0
    %567 = vmatprep.subr.mxu0 0.0
    %568 = vmatpush1.msra.mxu0 0.0
    %569 = vmatprep.subr.mxu0 0.0
    %570 = vmatpush1.msra.mxu0 0.0
    %571 = vmatprep.subr.mxu0 0.0
    %572 = vmatpush1.msra.mxu0 0.0
    %573 = vmatprep.subr.mxu0 0.0
    %574 = vmatpush1.msra.mxu0 0.0
    %575 = vmatprep.subr.mxu0 0.0
    %576 = vmatpush1.msra.mxu0 0.0
    %577 = vmatprep.subr.mxu0 0.0
    %578 = vmatpush1.msra.mxu0 0.0
    %579 = vmatprep.subr.mxu0 0.0
    %580 = vmatpush1.msra.mxu0 0.0
    %581 = vmatprep.subr.mxu0 0.0
    %582 = vmatpush1.msra.mxu0 0.0
    %583 = vmatprep.mubr.f32.mxu0 0.0
    %584 = vmatmul.mubr.f32.gmra.mrb[0].mxu0 %v511
    %v585 = vpop.f32.mrb[0].mxu0
    %v586 = vadd.f32 %v279, %v585
    %v587 = vpop.f32.mrb[0].mxu0
    %588 = vmatprep.mubr.f32.mxu0 0.0
    %589 = vmatmul.mubr.f32.gmra.mrb[0].mxu0 %v513
    %v590 = vpop.f32.mrb[0].mxu0
    %v591 = vadd.f32 %v280, %v590
    %v592 = vpop.f32.mrb[0].mxu0
    %593 = vmatprep.mubr.f32.mxu0 0.0
    %594 = vmatmul.mubr.f32.gmra.mrb[0].mxu0 %v515
    %v595 = vpop.f32.mrb[0].mxu0
    %v596 = vadd.f32 %v281, %v595
    %v597 = vpop.f32.mrb[0].mxu0
    %598 = vmatprep.mubr.f32.mxu0 0.0
    %599 = vmatmul.mubr.f32.gmra.mrb[0].mxu0 %v517
    %v600 = vpop.f32.mrb[0].mxu0
    %v601 = vadd.f32 %v282, %v600
    %v602 = vpop.f32.mrb[0].mxu0
    %603 = vdwg.mxu0
    %604 = vmax.xlane.f32.xlu0 %v586
    %v605 = vpop.xlane.xlu0 %604
    %606 = vmax.xlane.f32.xlu0 %v591
    %v607 = vpop.xlane.xlu0 %606
    %608 = vmax.xlane.f32.xlu0 %v596
    %v609 = vpop.xlane.xlu0 %608
    %610 = vmax.xlane.f32.xlu0 %v601
    %v611 = vpop.xlane.xlu0 %610
    %v612 = vsub.f32 %v586, %v605
    %v613 = vsub.f32 %v591, %v607
    %v614 = vsub.f32 %v596, %v609
    %v615 = vsub.f32 %v601, %v611
    %v616 = vmul.f32 %v612, 1.442695
    %v617 = vpow.pop %v616
    %v618 = vmul.f32 %v613, 1.442695
    %v619 = vpow.pop %v618
    %v620 = vmul.f32 %v614, 1.442695
    %v621 = vpow.pop %v620
    %v622 = vmul.f32 %v615, 1.442695
    %v623 = vpow.pop %v622
    %640 = vrot.lane.b32.xlu0 %v283, 64
    %v641 = vpop.permute.xlu0 %640
    %642 = vrot.lane.b32.xlu0 %v284, 64
    %v643 = vpop.permute.xlu0 %642
    %644 = vrot.lane.b32.xlu0 %v285, 64
    %v645 = vpop.permute.xlu0 %644
    %646 = vrot.lane.b32.xlu0 %v286, 64
    %v647 = vpop.permute.xlu0 %646
    %648 = vrot.lane.b32.xlu0 %v287, 64
    %v649 = vpop.permute.xlu0 %648
    %650 = vrot.lane.b32.xlu0 %v288, 64
    %v651 = vpop.permute.xlu0 %650
    %652 = vrot.lane.b32.xlu0 %v289, 64
    %v653 = vpop.permute.xlu0 %652
    %654 = vrot.lane.b32.xlu0 %v290, 64
    %v655 = vpop.permute.xlu0 %654
    %656 = vrot.lane.b32.xlu0 %v291, 64
    %v657 = vpop.permute.xlu0 %656
    %658 = vrot.lane.b32.xlu0 %v292, 64
    %v659 = vpop.permute.xlu0 %658
    %660 = vrot.lane.b32.xlu0 %v293, 64
    %v661 = vpop.permute.xlu0 %660
    %662 = vrot.lane.b32.xlu0 %v294, 64
    %v663 = vpop.permute.xlu0 %662
    %664 = vrot.lane.b32.xlu0 %v295, 64
    %v665 = vpop.permute.xlu0 %664
    %666 = vrot.lane.b32.xlu0 %v296, 64
    %v667 = vpop.permute.xlu0 %666
    %668 = vrot.lane.b32.xlu0 %v297, 64
    %v669 = vpop.permute.xlu0 %668
    %670 = vrot.lane.b32.xlu0 %v298, 64
    %v671 = vpop.permute.xlu0 %670
    %v688 = vmul.f32 %v387, %v641
    %v689 = vmul.f32 %v392, %v643
    %v690 = vmul.f32 %v397, %v645
    %v691 = vmul.f32 %v402, %v647
    %v692 = vmul.f32 %v387, %v649
    %v693 = vmul.f32 %v392, %v651
    %v694 = vmul.f32 %v397, %v653
    %v695 = vmul.f32 %v402, %v655
    %v696 = vmul.f32 %v387, %v657
    %v697 = vmul.f32 %v392, %v659
    %v698 = vmul.f32 %v397, %v661
    %v699 = vmul.f32 %v402, %v663
    %v700 = vmul.f32 %v387, %v665
    %v701 = vmul.f32 %v392, %v667
    %v702 = vmul.f32 %v397, %v669
    %v703 = vmul.f32 %v402, %v671
    %720 = vrot.lane.b32.xlu0 %v688, 64
    %v721 = vpop.permute.xlu0 %720
    %722 = vrot.lane.b32.xlu0 %v689, 64
    %v723 = vpop.permute.xlu0 %722
    %724 = vrot.lane.b32.xlu0 %v690, 64
    %v725 = vpop.permute.xlu0 %724
    %726 = vrot.lane.b32.xlu0 %v691, 64
    %v727 = vpop.permute.xlu0 %726
    %728 = vrot.lane.b32.xlu0 %v692, 64
    %v729 = vpop.permute.xlu0 %728
    %730 = vrot.lane.b32.xlu0 %v693, 64
    %v731 = vpop.permute.xlu0 %730
    %732 = vrot.lane.b32.xlu0 %v694, 64
    %v733 = vpop.permute.xlu0 %732
    %734 = vrot.lane.b32.xlu0 %v695, 64
    %v735 = vpop.permute.xlu0 %734
    %736 = vrot.lane.b32.xlu0 %v696, 64
    %v737 = vpop.permute.xlu0 %736
    %738 = vrot.lane.b32.xlu0 %v697, 64
    %v739 = vpop.permute.xlu0 %738
    %740 = vrot.lane.b32.xlu0 %v698, 64
    %v741 = vpop.permute.xlu0 %740
    %742 = vrot.lane.b32.xlu0 %v699, 64
    %v743 = vpop.permute.xlu0 %742
    %744 = vrot.lane.b32.xlu0 %v700, 64
    %v745 = vpop.permute.xlu0 %744
    %746 = vrot.lane.b32.xlu0 %v701, 64
    %v747 = vpop.permute.xlu0 %746
    %748 = vrot.lane.b32.xlu0 %v702, 64
    %v749 = vpop.permute.xlu0 %748
    %750 = vrot.lane.b32.xlu0 %v703, 64
    %v751 = vpop.permute.xlu0 %750
    %768 = vmatprep.subr.mxu0 0.0
    %769 = vmatpush1.msra.mxu0 %v721
    %770 = vmatprep.subr.mxu0 0.0
    %771 = vmatpush1.msra.mxu0 %v723
    %772 = vmatprep.subr.mxu0 0.0
    %773 = vmatpush1.msra.mxu0 %v725
    %774 = vmatprep.subr.mxu0 0.0
    %775 = vmatpush1.msra.mxu0 %v727
    %776 = vmatprep.subr.mxu0 0.0
    %777 = vmatpush1.msra.mxu0 %v729
    %778 = vmatprep.subr.mxu0 0.0
    %779 = vmatpush1.msra.mxu0 %v731
    %780 = vmatprep.subr.mxu0 0.0
    %781 = vmatpush1.msra.mxu0 %v733
    %782 = vmatprep.subr.mxu0 0.0
    %783 = vmatpush1.msra.mxu0 %v735
    %784 = vmatprep.subr.mxu0 0.0
    %785 = vmatpush1.msra.mxu0 %v737
    %786 = vmatprep.subr.mxu0 0.0
    %787 = vmatpush1.msra.mxu0 %v739
    %788 = vmatprep.subr.mxu0 0.0
    %789 = vmatpush1.msra.mxu0 %v741
    %790 = vmatprep.subr.mxu0 0.0
    %791 = vmatpush1.msra.mxu0 %v743
    %792 = vmatprep.subr.mxu0 0.0
    %793 = vmatpush1.msra.mxu0 %v745
    %794 = vmatprep.subr.mxu0 0.0
    %795 = vmatpush1.msra.mxu0 %v747
    %796 = vmatprep.subr.mxu0 0.0
    %797 = vmatpush1.msra.mxu0 %v749
    %798 = vmatprep.subr.mxu0 0.0
    %799 = vmatpush1.msra.mxu0 %v751
    %800 = vmatprep.subr.mxu0 0.0
    %801 = vmatpush1.msra.mxu0 0.0
    %802 = vmatprep.subr.mxu0 0.0
    %803 = vmatpush1.msra.mxu0 0.0
    %804 = vmatprep.subr.mxu0 0.0
    %805 = vmatpush1.msra.mxu0 0.0
    %806 = vmatprep.subr.mxu0 0.0
    %807 = vmatpush1.msra.mxu0 0.0
    %808 = vmatprep.subr.mxu0 0.0
    %809 = vmatpush1.msra.mxu0 0.0
    %810 = vmatprep.subr.mxu0 0.0
    %811 = vmatpush1.msra.mxu0 0.0
    %812 = vmatprep.subr.mxu0 0.0
    %813 = vmatpush1.msra.mxu0 0.0
    %814 = vmatprep.subr.mxu0 0.0
    %815 = vmatpush1.msra.mxu0 0.0
    %816 = vmatprep.subr.mxu0 0.0
    %817 = vmatpush1.msra.mxu0 0.0
    %818 = vmatprep.subr.mxu0 0.0
    %819 = vmatpush1.msra.mxu0 0.0
    %820 = vmatprep.subr.mxu0 0.0
    %821 = vmatpush1.msra.mxu0 0.0
    %822 = vmatprep.subr.mxu0 0.0
    %823 = vmatpush1.msra.mxu0 0.0
    %824 = vmatprep.subr.mxu0 0.0
    %825 = vmatpush1.msra.mxu0 0.0
    %826 = vmatprep.subr.mxu0 0.0
    %827 = vmatpush1.msra.mxu0 0.0
    %828 = vmatprep.subr.mxu0 0.0
    %829 = vmatpush1.msra.mxu0 0.0
    %830 = vmatprep.subr.mxu0 0.0
    %831 = vmatpush1.msra.mxu0 0.0
    %832 = vmatprep.mubr.f32.mxu0 0.0
    %833 = vmatmul.mubr.f32.gmra.mrb[0].mxu0 %v617
    %v834 = vpop.f32.mrb[0].mxu0
    %v835 = vadd.f32 0.0, %v834
    %v836 = vpop.f32.mrb[0].mxu0
    %837 = vmatprep.mubr.f32.mxu0 0.0
    %838 = vmatmul.mubr.f32.gmra.mrb[0].mxu0 %v619
    %v839 = vpop.f32.mrb[0].mxu0
    %v840 = vadd.f32 0.0, %v839
    %v841 = vpop.f32.mrb[0].mxu0
    %842 = vmatprep.mubr.f32.mxu0 0.0
    %843 = vmatmul.mubr.f32.gmra.mrb[0].mxu0 %v621
    %v844 = vpop.f32.mrb[0].mxu0
    %v845 = vadd.f32 0.0, %v844
    %v846 = vpop.f32.mrb[0].mxu0
    %847 = vmatprep.mubr.f32.mxu0 0.0
    %848 = vmatmul.mubr.f32.gmra.mrb[0].mxu0 %v623
    %v849 = vpop.f32.mrb[0].mxu0
    %v850 = vadd.f32 0.0, %v849
    %v851 = vpop.f32.mrb[0].mxu0
    %852 = vdwg.mxu0
    %853 = vmatprep.subr.mxu0 0.0
    %854 = vmatpush1.msra.mxu0 %v283
    %855 = vmatprep.subr.mxu0 0.0
    %856 = vmatpush1.msra.mxu0 %v284
    %857 = vmatprep.subr.mxu0 0.0
    %858 = vmatpush1.msra.mxu0 %v285
    %859 = vmatprep.subr.mxu0 0.0
    %860 = vmatpush1.msra.mxu0 %v286
    %861 = vmatprep.subr.mxu0 0.0
    %862 = vmatpush1.msra.mxu0 %v287
    %863 = vmatprep.subr.mxu0 0.0
    %864 = vmatpush1.msra.mxu0 %v288
    %865 = vmatprep.subr.mxu0 0.0
    %866 = vmatpush1.msra.mxu0 %v289
    %867 = vmatprep.subr.mxu0 0.0
    %868 = vmatpush1.msra.mxu0 %v290
    %869 = vmatprep.subr.mxu0 0.0
    %870 = vmatpush1.msra.mxu0 %v291
    %871 = vmatprep.subr.mxu0 0.0
    %872 = vmatpush1.msra.mxu0 %v292
    %873 = vmatprep.subr.mxu0 0.0
    %874 = vmatpush1.msra.mxu0 %v293
    %875 = vmatprep.subr.mxu0 0.0
    %876 = vmatpush1.msra.mxu0 %v294
    %877 = vmatprep.subr.mxu0 0.0
    %878 = vmatpush1.msra.mxu0 %v295
    %879 = vmatprep.subr.mxu0 0.0
    %880 = vmatpush1.msra.mxu0 %v296
    %881 = vmatprep.subr.mxu0 0.0
    %882 = vmatpush1.msra.mxu0 %v297
    %883 = vmatprep.subr.mxu0 0.0
    %884 = vmatpush1.msra.mxu0 %v298
    %885 = vmatprep.subr.mxu0 0.0
    %886 = vmatpush1.msra.mxu0 0.0
    %887 = vmatprep.subr.mxu0 0.0
    %888 = vmatpush1.msra.mxu0 0.0
    %889 = vmatprep.subr.mxu0 0.0
    %890 = vmatpush1.msra.mxu0 0.0
    %891 = vmatprep.subr.mxu0 0.0
    %892 = vmatpush1.msra.mxu0 0.0
    %893 = vmatprep.subr.mxu0 0.0
    %894 = vmatpush1.msra.mxu0 0.0
    %895 = vmatprep.subr.mxu0 0.0
    %896 = vmatpush1.msra.mxu0 0.0
    %897 = vmatprep.subr.mxu0 0.0
    %898 = vmatpush1.msra.mxu0 0.0
    %899 = vmatprep.subr.mxu0 0.0
    %900 = vmatpush1.msra.mxu0 0.0
    %901 = vmatprep.subr.mxu0 0.0
    %902 = vmatpush1.msra.mxu0 0.0
    %903 = vmatprep.subr.mxu0 0.0
    %904 = vmatpush1.msra.mxu0 0.0
    %905 = vmatprep.subr.mxu0 0.0
    %906 = vmatpush1.msra.mxu0 0.0
    %907 = vmatprep.subr.mxu0 0.0
    %908 = vmatpush1.msra.mxu0 0.0
    %909 = vmatprep.subr.mxu0 0.0
    %910 = vmatpush1.msra.mxu0 0.0
    %911 = vmatprep.subr.mxu0 0.0
    %912 = vmatpush1.msra.mxu0 0.0
    %913 = vmatprep.subr.mxu0 0.0
    %914 = vmatpush1.msra.mxu0 0.0
    %915 = vmatprep.subr.mxu0 0.0
    %916 = vmatpush1.msra.mxu0 0.0
    %917 = vmatprep.mubr.f32.mxu0 0.0
    %918 = vmatmul.mubr.f32.gmra.mrb[0].mxu0 %v617
    %v919 = vpop.f32.mrb[0].mxu0
    %v920 = vadd.f32 0.0, %v919
    %v921 = vpop.f32.mrb[0].mxu0
    %922 = vmatprep.mubr.f32.mxu0 0.0
    %923 = vmatmul.mubr.f32.gmra.mrb[0].mxu0 %v619
    %v924 = vpop.f32.mrb[0].mxu0
    %v925 = vadd.f32 0.0, %v924
    %v926 = vpop.f32.mrb[0].mxu0
    %927 = vmatprep.mubr.f32.mxu0 0.0
    %928 = vmatmul.mubr.f32.gmra.mrb[0].mxu0 %v621
    %v929 = vpop.f32.mrb[0].mxu0
    %v930 = vadd.f32 0.0, %v929
    %v931 = vpop.f32.mrb[0].mxu0
    %932 = vmatprep.mubr.f32.mxu0 0.0
    %933 = vmatmul.mubr.f32.gmra.mrb[0].mxu0 %v623
    %v934 = vpop.f32.mrb[0].mxu0
    %v935 = vadd.f32 0.0, %v934
    %v936 = vpop.f32.mrb[0].mxu0
    %937 = vdwg.mxu0
    %v938 = vrcp.pop %v920
    %v939 = vrcp.pop %v925
    %v940 = vrcp.pop %v930
    %v941 = vrcp.pop %v935
    %v942 = vmul.f32 %v835, %v938
    %v943 = vmul.f32 %v840, %v939
    %v944 = vmul.f32 %v845, %v940
    %v945 = vmul.f32 %v850, %v941
    %v946 = vld [vmem:[%s4] sm:$0xff]
    %v947 = vld [vmem:[%s4 + $0x8] sm:$0xff]
    %v948 = vld [vmem:[%s4 + $0x10] sm:$0xff]
    %v949 = vld [vmem:[%s4 + $0x18] sm:$0xff]
    %v950 = vld [vmem:[%s5 + $0x4] sm:$0x1]
    %v951 = vlaneseq
    %v952 = vshrl.u32 %v951, 7
    %v953 = vsub.s32 0, %v952
    %v954 = vrot.slane %v950, %v953
    %v956 = vsel %vm205, %v942, 0
    %v959 = vsel %vm205, %v943, 0
    %v962 = vsel %vm205, %v944, 0
    %v965 = vsel %vm205, %v945, 0
    %967 = vmatprep.subr.mxu0 0.0
    %968 = vmatpush1.msra.mxu0 %v946
    %969 = vmatprep.subr.mxu0 0.0
    %970 = vmatpush1.msra.mxu0 %v947
    %971 = vmatprep.subr.mxu0 0.0
    %972 = vmatpush1.msra.mxu0 %v948
    %973 = vmatprep.subr.mxu0 0.0
    %974 = vmatpush1.msra.mxu0 %v949
    %975 = vmatprep.subr.mxu0 0.0
    %976 = vmatpush1.msra.mxu0 0.0
    %977 = vmatprep.subr.mxu0 0.0
    %978 = vmatpush1.msra.mxu0 0.0
    %979 = vmatprep.subr.mxu0 0.0
    %980 = vmatpush1.msra.mxu0 0.0
    %981 = vmatprep.subr.mxu0 0.0
    %982 = vmatpush1.msra.mxu0 0.0
    %983 = vmatprep.subr.mxu0 0.0
    %984 = vmatpush1.msra.mxu0 0.0
    %985 = vmatprep.subr.mxu0 0.0
    %986 = vmatpush1.msra.mxu0 0.0
    %987 = vmatprep.subr.mxu0 0.0
    %988 = vmatpush1.msra.mxu0 0.0
    %989 = vmatprep.subr.mxu0 0.0
    %990 = vmatpush1.msra.mxu0 0.0
    %991 = vmatprep.subr.mxu0 0.0
    %992 = vmatpush1.msra.mxu0 0.0
    %993 = vmatprep.subr.mxu0 0.0
    %994 = vmatpush1.msra.mxu0 0.0
    %995 = vmatprep.subr.mxu0 0.0
    %996 = vmatpush1.msra.mxu0 0.0
    %997 = vmatprep.subr.mxu0 0.0
    %998 = vmatpush1.msra.mxu0 0.0
    %999 = vmatprep.subr.mxu0 0.0
    %1000 = vmatpush1.msra.mxu0 0.0
    %1001 = vmatprep.subr.mxu0 0.0
    %1002 = vmatpush1.msra.mxu0 0.0
    %1003 = vmatprep.subr.mxu0 0.0
    %1004 = vmatpush1.msra.mxu0 0.0
    %1005 = vmatprep.subr.mxu0 0.0
    %1006 = vmatpush1.msra.mxu0 0.0
    %1007 = vmatprep.subr.mxu0 0.0
    %1008 = vmatpush1.msra.mxu0 0.0
    %1009 = vmatprep.subr.mxu0 0.0
    %1010 = vmatpush1.msra.mxu0 0.0
    %1011 = vmatprep.subr.mxu0 0.0
    %1012 = vmatpush1.msra.mxu0 0.0
    %1013 = vmatprep.subr.mxu0 0.0
    %1014 = vmatpush1.msra.mxu0 0.0
    %1015 = vmatprep.subr.mxu0 0.0
    %1016 = vmatpush1.msra.mxu0 0.0
    %1017 = vmatprep.subr.mxu0 0.0
    %1018 = vmatpush1.msra.mxu0 0.0
    %1019 = vmatprep.subr.mxu0 0.0
    %1020 = vmatpush1.msra.mxu0 0.0
    %1021 = vmatprep.subr.mxu0 0.0
    %1022 = vmatpush1.msra.mxu0 0.0
    %1023 = vmatprep.subr.mxu0 0.0
    %1024 = vmatpush1.msra.mxu0 0.0
    %1025 = vmatprep.subr.mxu0 0.0
    %1026 = vmatpush1.msra.mxu0 0.0
    %1027 = vmatprep.subr.mxu0 0.0
    %1028 = vmatpush1.msra.mxu0 0.0
    %1029 = vmatprep.subr.mxu0 0.0
    %1030 = vmatpush1.msra.mxu0 0.0
    %1031 = vmatprep.mubr.f32.mxu0 0.0
    %1032 = vmatmul.mubr.f32.gmra.mrb[0].mxu0 %v956
    %v1033 = vpop.f32.mrb[0].mxu0
    %v1034 = vadd.f32 %v954, %v1033
    %v1035 = vpop.f32.mrb[0].mxu0
    %1036 = vmatprep.mubr.f32.mxu0 0.0
    %1037 = vmatmul.mubr.f32.gmra.mrb[0].mxu0 %v959
    %v1038 = vpop.f32.mrb[0].mxu0
    %v1039 = vadd.f32 %v954, %v1038
    %v1040 = vpop.f32.mrb[0].mxu0
    %1041 = vmatprep.mubr.f32.mxu0 0.0
    %1042 = vmatmul.mubr.f32.gmra.mrb[0].mxu0 %v962
    %v1043 = vpop.f32.mrb[0].mxu0
    %v1044 = vadd.f32 %v954, %v1043
    %v1045 = vpop.f32.mrb[0].mxu0
    %1046 = vmatprep.mubr.f32.mxu0 0.0
    %1047 = vmatmul.mubr.f32.gmra.mrb[0].mxu0 %v965
    %v1048 = vpop.f32.mrb[0].mxu0
    %v1049 = vadd.f32 %v954, %v1048
    %v1050 = vpop.f32.mrb[0].mxu0
    %1051 = vdwg.mxu0
    %v1052 = vadd.f32 %v271, %v1034
    %v1053 = vadd.f32 %v272, %v1039
    %v1054 = vadd.f32 %v273, %v1044
    %v1055 = vadd.f32 %v274, %v1049
    %v1056 = vld [vmem:[%s5 + $0x5] sm:$0x1]
    %v1057 = vld [vmem:[%s5 + $0x6] sm:$0x1]
    %v1058 = vsel %vm205, %v1052, 0.0
    %1059 = vadd.xlane.f32.xlu0 %v1058
    %v1060 = vpop.xlane.xlu0 %1059
    %v1061 = vsel %vm205, %v1053, 0.0
    %1062 = vadd.xlane.f32.xlu0 %v1061
    %v1063 = vpop.xlane.xlu0 %1062
    %v1064 = vsel %vm205, %v1054, 0.0
    %1065 = vadd.xlane.f32.xlu0 %v1064
    %v1066 = vpop.xlane.xlu0 %1065
    %v1067 = vsel %vm205, %v1055, 0.0
    %1068 = vadd.xlane.f32.xlu0 %v1067
    %v1069 = vpop.xlane.xlu0 %1068
    %v1070 = vmul.f32 %v1060, %v218
    %v1071 = vmul.f32 %v1063, %v218
    %v1072 = vmul.f32 %v1066, %v218
    %v1073 = vmul.f32 %v1069, %v218
    %v1074 = vsub.f32 %v1052, %v1070
    %v1075 = vsub.f32 %v1053, %v1071
    %v1076 = vsub.f32 %v1054, %v1072
    %v1077 = vsub.f32 %v1055, %v1073
    %v1078 = vmul.f32 %v1074, %v1074
    %v1079 = vmul.f32 %v1075, %v1075
    %v1080 = vmul.f32 %v1076, %v1076
    %v1081 = vmul.f32 %v1077, %v1077
    %v1082 = vsel %vm205, %v1078, 0.0
    %1083 = vadd.xlane.f32.xlu0 %v1082
    %v1084 = vpop.xlane.xlu0 %1083
    %v1085 = vsel %vm205, %v1079, 0.0
    %1086 = vadd.xlane.f32.xlu0 %v1085
    %v1087 = vpop.xlane.xlu0 %1086
    %v1088 = vsel %vm205, %v1080, 0.0
    %1089 = vadd.xlane.f32.xlu0 %v1088
    %v1090 = vpop.xlane.xlu0 %1089
    %v1091 = vsel %vm205, %v1081, 0.0
    %1092 = vadd.xlane.f32.xlu0 %v1091
    %v1093 = vpop.xlane.xlu0 %1092
    %v1094 = vmul.f32 %v1084, %v218
    %v1095 = vmul.f32 %v1087, %v218
    %v1096 = vmul.f32 %v1090, %v218
    %v1097 = vmul.f32 %v1093, %v218
    %v1098 = vadd.f32 %v1094, 1e-05
    %v1099 = vadd.f32 %v1095, 1e-05
    %v1100 = vadd.f32 %v1096, 1e-05
    %v1101 = vadd.f32 %v1097, 1e-05
    %v1102 = vrsqrt.pop %v1098
    %v1103 = vrsqrt.pop %v1099
    %v1104 = vrsqrt.pop %v1100
    %v1105 = vrsqrt.pop %v1101
    %v1106 = vmul.f32 %v1074, %v1102
    %v1107 = vmul.f32 %v1075, %v1103
    %v1108 = vmul.f32 %v1076, %v1104
    %v1109 = vmul.f32 %v1077, %v1105
    %v1110 = vlaneseq
    %v1111 = vshrl.u32 %v1110, 7
    %v1112 = vsub.s32 0, %v1111
    %v1113 = vrot.slane %v1056, %v1112
    %v1114 = vmul.f32 %v1106, %v1113
    %v1115 = vmul.f32 %v1107, %v1113
    %v1116 = vmul.f32 %v1108, %v1113
    %v1117 = vmul.f32 %v1109, %v1113
    %v1118 = vlaneseq
    %v1119 = vshrl.u32 %v1118, 7
    %v1120 = vsub.s32 0, %v1119
    %v1121 = vrot.slane %v1057, %v1120
    %v1122 = vadd.f32 %v1114, %v1121
    %v1123 = vadd.f32 %v1115, %v1121
    %v1124 = vadd.f32 %v1116, %v1121
    %v1125 = vadd.f32 %v1117, %v1121
    %v1126 = vld [vmem:[%s3] sm:$0xff]
    %v1127 = vld [vmem:[%s3 + $0x8] sm:$0xff]
    %v1128 = vld [vmem:[%s3 + $0x10] sm:$0xff]
    %v1129 = vld [vmem:[%s3 + $0x18] sm:$0xff]
    %v1130 = vld [vmem:[%s5 + $0x7] sm:$0x1]
    %v1131 = vlaneseq
    %v1132 = vshrl.u32 %v1131, 7
    %v1133 = vsub.s32 0, %v1132
    %v1134 = vrot.slane %v1130, %v1133
    %v1136 = vsel %vm205, %v1122, 0
    %v1139 = vsel %vm205, %v1123, 0
    %v1142 = vsel %vm205, %v1124, 0
    %v1145 = vsel %vm205, %v1125, 0
    %1147 = vmatprep.subr.mxu0 0.0
    %1148 = vmatpush1.msra.mxu0 %v1126
    %1149 = vmatprep.subr.mxu0 0.0
    %1150 = vmatpush1.msra.mxu0 %v1127
    %1151 = vmatprep.subr.mxu0 0.0
    %1152 = vmatpush1.msra.mxu0 %v1128
    %1153 = vmatprep.subr.mxu0 0.0
    %1154 = vmatpush1.msra.mxu0 %v1129
    %1155 = vmatprep.subr.mxu0 0.0
    %1156 = vmatpush1.msra.mxu0 0.0
    %1157 = vmatprep.subr.mxu0 0.0
    %1158 = vmatpush1.msra.mxu0 0.0
    %1159 = vmatprep.subr.mxu0 0.0
    %1160 = vmatpush1.msra.mxu0 0.0
    %1161 = vmatprep.subr.mxu0 0.0
    %1162 = vmatpush1.msra.mxu0 0.0
    %1163 = vmatprep.subr.mxu0 0.0
    %1164 = vmatpush1.msra.mxu0 0.0
    %1165 = vmatprep.subr.mxu0 0.0
    %1166 = vmatpush1.msra.mxu0 0.0
    %1167 = vmatprep.subr.mxu0 0.0
    %1168 = vmatpush1.msra.mxu0 0.0
    %1169 = vmatprep.subr.mxu0 0.0
    %1170 = vmatpush1.msra.mxu0 0.0
    %1171 = vmatprep.subr.mxu0 0.0
    %1172 = vmatpush1.msra.mxu0 0.0
    %1173 = vmatprep.subr.mxu0 0.0
    %1174 = vmatpush1.msra.mxu0 0.0
    %1175 = vmatprep.subr.mxu0 0.0
    %1176 = vmatpush1.msra.mxu0 0.0
    %1177 = vmatprep.subr.mxu0 0.0
    %1178 = vmatpush1.msra.mxu0 0.0
    %1179 = vmatprep.subr.mxu0 0.0
    %1180 = vmatpush1.msra.mxu0 0.0
    %1181 = vmatprep.subr.mxu0 0.0
    %1182 = vmatpush1.msra.mxu0 0.0
    %1183 = vmatprep.subr.mxu0 0.0
    %1184 = vmatpush1.msra.mxu0 0.0
    %1185 = vmatprep.subr.mxu0 0.0
    %1186 = vmatpush1.msra.mxu0 0.0
    %1187 = vmatprep.subr.mxu0 0.0
    %1188 = vmatpush1.msra.mxu0 0.0
    %1189 = vmatprep.subr.mxu0 0.0
    %1190 = vmatpush1.msra.mxu0 0.0
    %1191 = vmatprep.subr.mxu0 0.0
    %1192 = vmatpush1.msra.mxu0 0.0
    %1193 = vmatprep.subr.mxu0 0.0
    %1194 = vmatpush1.msra.mxu0 0.0
    %1195 = vmatprep.subr.mxu0 0.0
    %1196 = vmatpush1.msra.mxu0 0.0
    %1197 = vmatprep.subr.mxu0 0.0
    %1198 = vmatpush1.msra.mxu0 0.0
    %1199 = vmatprep.subr.mxu0 0.0
    %1200 = vmatpush1.msra.mxu0 0.0
    %1201 = vmatprep.subr.mxu0 0.0
    %1202 = vmatpush1.msra.mxu0 0.0
    %1203 = vmatprep.subr.mxu0 0.0
    %1204 = vmatpush1.msra.mxu0 0.0
    %1205 = vmatprep.subr.mxu0 0.0
    %1206 = vmatpush1.msra.mxu0 0.0
    %1207 = vmatprep.subr.mxu0 0.0
    %1208 = vmatpush1.msra.mxu0 0.0
    %1209 = vmatprep.subr.mxu0 0.0
    %1210 = vmatpush1.msra.mxu0 0.0
    %1211 = vmatprep.mubr.f32.mxu0 0.0
    %1212 = vmatmul.mubr.f32.gmra.mrb[0].mxu0 %v1136
    %v1213 = vpop.f32.mrb[0].mxu0
    %v1214 = vadd.f32 %v1134, %v1213
    %v1215 = vpop.f32.mrb[0].mxu0
    %1216 = vmatprep.mubr.f32.mxu0 0.0
    %1217 = vmatmul.mubr.f32.gmra.mrb[0].mxu0 %v1139
    %v1218 = vpop.f32.mrb[0].mxu0
    %v1219 = vadd.f32 %v1134, %v1218
    %v1220 = vpop.f32.mrb[0].mxu0
    %1221 = vmatprep.mubr.f32.mxu0 0.0
    %1222 = vmatmul.mubr.f32.gmra.mrb[0].mxu0 %v1142
    %v1223 = vpop.f32.mrb[0].mxu0
    %v1224 = vadd.f32 %v1134, %v1223
    %v1225 = vpop.f32.mrb[0].mxu0
    %1226 = vmatprep.mubr.f32.mxu0 0.0
    %1227 = vmatmul.mubr.f32.gmra.mrb[0].mxu0 %v1145
    %v1228 = vpop.f32.mrb[0].mxu0
    %v1229 = vadd.f32 %v1134, %v1228
    %v1230 = vpop.f32.mrb[0].mxu0
    %1231 = vdwg.mxu0
    %v1232 = vmul.f32 %v1214, 0.5
    %v1233 = vmul.f32 %v1219, 0.5
    %v1234 = vmul.f32 %v1224, 0.5
    %v1235 = vmul.f32 %v1229, 0.5
    %v1236 = vmul.f32 %v1214, 0.044715
    %v1237 = vmul.f32 %v1219, 0.044715
    %v1238 = vmul.f32 %v1224, 0.044715
    %v1239 = vmul.f32 %v1229, 0.044715
    %v1240 = vmul.f32 %v1236, %v1214
    %v1241 = vmul.f32 %v1237, %v1219
    %v1242 = vmul.f32 %v1238, %v1224
    %v1243 = vmul.f32 %v1239, %v1229
    %v1244 = vmul.f32 %v1240, %v1214
    %v1245 = vmul.f32 %v1241, %v1219
    %v1246 = vmul.f32 %v1242, %v1224
    %v1247 = vmul.f32 %v1243, %v1229
    %v1248 = vadd.f32 %v1214, %v1244
    %v1249 = vadd.f32 %v1219, %v1245
    %v1250 = vadd.f32 %v1224, %v1246
    %v1251 = vadd.f32 %v1229, %v1247
    %v1252 = vmul.f32 %v1248, 0.7978846
    %v1253 = vmul.f32 %v1249, 0.7978846
    %v1254 = vmul.f32 %v1250, 0.7978846
    %v1255 = vmul.f32 %v1251, 0.7978846
    %v1256 = vtanh.pop %v1252
    %v1257 = vtanh.pop %v1253
    %v1258 = vtanh.pop %v1254
    %v1259 = vtanh.pop %v1255
    %v1260 = vadd.f32 %v1256, 1.0
    %v1261 = vadd.f32 %v1257, 1.0
    %v1262 = vadd.f32 %v1258, 1.0
    %v1263 = vadd.f32 %v1259, 1.0
    %v1264 = vmul.f32 %v1232, %v1260
    %v1265 = vmul.f32 %v1233, %v1261
    %v1266 = vmul.f32 %v1234, %v1262
    %v1267 = vmul.f32 %v1235, %v1263
    %v1268 = vld [vmem:[%s4 + $0x20] sm:$0xff]
    %v1269 = vld [vmem:[%s4 + $0x28] sm:$0xff]
    %v1270 = vld [vmem:[%s4 + $0x30] sm:$0xff]
    %v1271 = vld [vmem:[%s4 + $0x38] sm:$0xff]
    %v1272 = vld [vmem:[%s4 + $0x40] sm:$0xff]
    %v1273 = vld [vmem:[%s4 + $0x48] sm:$0xff]
    %v1274 = vld [vmem:[%s4 + $0x50] sm:$0xff]
    %v1275 = vld [vmem:[%s4 + $0x58] sm:$0xff]
    %v1276 = vld [vmem:[%s5 + $0x8] sm:$0x1]
    %v1277 = vlaneseq
    %v1278 = vshrl.u32 %v1277, 7
    %v1279 = vsub.s32 0, %v1278
    %v1280 = vrot.slane %v1276, %v1279
    %v1282 = vsel %vm497, %v1264, 0
    %v1285 = vsel %vm497, %v1265, 0
    %v1288 = vsel %vm497, %v1266, 0
    %v1291 = vsel %vm497, %v1267, 0
    %1293 = vmatprep.subr.mxu0 0.0
    %1294 = vmatpush1.msra.mxu0 %v1268
    %1295 = vmatprep.subr.mxu0 0.0
    %1296 = vmatpush1.msra.mxu0 %v1269
    %1297 = vmatprep.subr.mxu0 0.0
    %1298 = vmatpush1.msra.mxu0 %v1270
    %1299 = vmatprep.subr.mxu0 0.0
    %1300 = vmatpush1.msra.mxu0 %v1271
    %1301 = vmatprep.subr.mxu0 0.0
    %1302 = vmatpush1.msra.mxu0 %v1272
    %1303 = vmatprep.subr.mxu0 0.0
    %1304 = vmatpush1.msra.mxu0 %v1273
    %1305 = vmatprep.subr.mxu0 0.0
    %1306 = vmatpush1.msra.mxu0 %v1274
    %1307 = vmatprep.subr.mxu0 0.0
    %1308 = vmatpush1.msra.mxu0 %v1275
    %1309 = vmatprep.subr.mxu0 0.0
    %1310 = vmatpush1.msra.mxu0 0.0
    %1311 = vmatprep.subr.mxu0 0.0
    %1312 = vmatpush1.msra.mxu0 0.0
    %1313 = vmatprep.subr.mxu0 0.0
    %1314 = vmatpush1.msra.mxu0 0.0
    %1315 = vmatprep.subr.mxu0 0.0
    %1316 = vmatpush1.msra.mxu0 0.0
    %1317 = vmatprep.subr.mxu0 0.0
    %1318 = vmatpush1.msra.mxu0 0.0
    %1319 = vmatprep.subr.mxu0 0.0
    %1320 = vmatpush1.msra.mxu0 0.0
    %1321 = vmatprep.subr.mxu0 0.0
    %1322 = vmatpush1.msra.mxu0 0.0
    %1323 = vmatprep.subr.mxu0 0.0
    %1324 = vmatpush1.msra.mxu0 0.0
    %1325 = vmatprep.subr.mxu0 0.0
    %1326 = vmatpush1.msra.mxu0 0.0
    %1327 = vmatprep.subr.mxu0 0.0
    %1328 = vmatpush1.msra.mxu0 0.0
    %1329 = vmatprep.subr.mxu0 0.0
    %1330 = vmatpush1.msra.mxu0 0.0
    %1331 = vmatprep.subr.mxu0 0.0
    %1332 = vmatpush1.msra.mxu0 0.0
    %1333 = vmatprep.subr.mxu0 0.0
    %1334 = vmatpush1.msra.mxu0 0.0
    %1335 = vmatprep.subr.mxu0 0.0
    %1336 = vmatpush1.msra.mxu0 0.0
    %1337 = vmatprep.subr.mxu0 0.0
    %1338 = vmatpush1.msra.mxu0 0.0
    %1339 = vmatprep.subr.mxu0 0.0
    %1340 = vmatpush1.msra.mxu0 0.0
    %1341 = vmatprep.subr.mxu0 0.0
    %1342 = vmatpush1.msra.mxu0 0.0
    %1343 = vmatprep.subr.mxu0 0.0
    %1344 = vmatpush1.msra.mxu0 0.0
    %1345 = vmatprep.subr.mxu0 0.0
    %1346 = vmatpush1.msra.mxu0 0.0
    %1347 = vmatprep.subr.mxu0 0.0
    %1348 = vmatpush1.msra.mxu0 0.0
    %1349 = vmatprep.subr.mxu0 0.0
    %1350 = vmatpush1.msra.mxu0 0.0
    %1351 = vmatprep.subr.mxu0 0.0
    %1352 = vmatpush1.msra.mxu0 0.0
    %1353 = vmatprep.subr.mxu0 0.0
    %1354 = vmatpush1.msra.mxu0 0.0
    %1355 = vmatprep.subr.mxu0 0.0
    %1356 = vmatpush1.msra.mxu0 0.0
    %1357 = vmatprep.mubr.f32.mxu0 0.0
    %1358 = vmatmul.mubr.f32.gmra.mrb[0].mxu0 %v1282
    %v1359 = vpop.f32.mrb[0].mxu0
    %v1360 = vadd.f32 %v1280, %v1359
    %v1361 = vpop.f32.mrb[0].mxu0
    %1362 = vmatprep.mubr.f32.mxu0 0.0
    %1363 = vmatmul.mubr.f32.gmra.mrb[0].mxu0 %v1285
    %v1364 = vpop.f32.mrb[0].mxu0
    %v1365 = vadd.f32 %v1280, %v1364
    %v1366 = vpop.f32.mrb[0].mxu0
    %1367 = vmatprep.mubr.f32.mxu0 0.0
    %1368 = vmatmul.mubr.f32.gmra.mrb[0].mxu0 %v1288
    %v1369 = vpop.f32.mrb[0].mxu0
    %v1370 = vadd.f32 %v1280, %v1369
    %v1371 = vpop.f32.mrb[0].mxu0
    %1372 = vmatprep.mubr.f32.mxu0 0.0
    %1373 = vmatmul.mubr.f32.gmra.mrb[0].mxu0 %v1291
    %v1374 = vpop.f32.mrb[0].mxu0
    %v1375 = vadd.f32 %v1280, %v1374
    %v1376 = vpop.f32.mrb[0].mxu0
    %1377 = vdwg.mxu0
    %v1378 = vadd.f32 %v1122, %v1360
    %v1379 = vadd.f32 %v1123, %v1365
    %v1380 = vadd.f32 %v1124, %v1370
    %v1381 = vadd.f32 %v1125, %v1375
    %v1382 = vld [vmem:[%s5 + $0x9] sm:$0x1]
    %v1383 = vld [vmem:[%s5 + $0xa] sm:$0x1]
    %v1384 = vsel %vm205, %v1378, 0.0
    %1385 = vadd.xlane.f32.xlu0 %v1384
    %v1386 = vpop.xlane.xlu0 %1385
    %v1387 = vsel %vm205, %v1379, 0.0
    %1388 = vadd.xlane.f32.xlu0 %v1387
    %v1389 = vpop.xlane.xlu0 %1388
    %v1390 = vsel %vm205, %v1380, 0.0
    %1391 = vadd.xlane.f32.xlu0 %v1390
    %v1392 = vpop.xlane.xlu0 %1391
    %v1393 = vsel %vm205, %v1381, 0.0
    %1394 = vadd.xlane.f32.xlu0 %v1393
    %v1395 = vpop.xlane.xlu0 %1394
    %v1396 = vmul.f32 %v1386, %v218
    %v1397 = vmul.f32 %v1389, %v218
    %v1398 = vmul.f32 %v1392, %v218
    %v1399 = vmul.f32 %v1395, %v218
    %v1400 = vsub.f32 %v1378, %v1396
    %v1401 = vsub.f32 %v1379, %v1397
    %v1402 = vsub.f32 %v1380, %v1398
    %v1403 = vsub.f32 %v1381, %v1399
    %v1404 = vmul.f32 %v1400, %v1400
    %v1405 = vmul.f32 %v1401, %v1401
    %v1406 = vmul.f32 %v1402, %v1402
    %v1407 = vmul.f32 %v1403, %v1403
    %v1408 = vsel %vm205, %v1404, 0.0
    %1409 = vadd.xlane.f32.xlu0 %v1408
    %v1410 = vpop.xlane.xlu0 %1409
    %v1411 = vsel %vm205, %v1405, 0.0
    %1412 = vadd.xlane.f32.xlu0 %v1411
    %v1413 = vpop.xlane.xlu0 %1412
    %v1414 = vsel %vm205, %v1406, 0.0
    %1415 = vadd.xlane.f32.xlu0 %v1414
    %v1416 = vpop.xlane.xlu0 %1415
    %v1417 = vsel %vm205, %v1407, 0.0
    %1418 = vadd.xlane.f32.xlu0 %v1417
    %v1419 = vpop.xlane.xlu0 %1418
    %v1420 = vmul.f32 %v1410, %v218
    %v1421 = vmul.f32 %v1413, %v218
    %v1422 = vmul.f32 %v1416, %v218
    %v1423 = vmul.f32 %v1419, %v218
    %v1424 = vadd.f32 %v1420, 1e-05
    %v1425 = vadd.f32 %v1421, 1e-05
    %v1426 = vadd.f32 %v1422, 1e-05
    %v1427 = vadd.f32 %v1423, 1e-05
    %v1428 = vrsqrt.pop %v1424
    %v1429 = vrsqrt.pop %v1425
    %v1430 = vrsqrt.pop %v1426
    %v1431 = vrsqrt.pop %v1427
    %v1432 = vmul.f32 %v1400, %v1428
    %v1433 = vmul.f32 %v1401, %v1429
    %v1434 = vmul.f32 %v1402, %v1430
    %v1435 = vmul.f32 %v1403, %v1431
    %v1436 = vlaneseq
    %v1437 = vshrl.u32 %v1436, 7
    %v1438 = vsub.s32 0, %v1437
    %v1439 = vrot.slane %v1382, %v1438
    %v1440 = vmul.f32 %v1432, %v1439
    %v1441 = vmul.f32 %v1433, %v1439
    %v1442 = vmul.f32 %v1434, %v1439
    %v1443 = vmul.f32 %v1435, %v1439
    %v1444 = vlaneseq
    %v1445 = vshrl.u32 %v1444, 7
    %v1446 = vsub.s32 0, %v1445
    %v1447 = vrot.slane %v1383, %v1446
    %v1448 = vadd.f32 %v1440, %v1447
    %v1449 = vadd.f32 %v1441, %v1447
    %v1450 = vadd.f32 %v1442, %v1447
    %v1451 = vadd.f32 %v1443, %v1447
    %s1452 = scalar_lea.vmem %s2, 32
    %v1453 = vld [vmem:[%s1452] sm:$0xff]
    %v1454 = vld [vmem:[%s1452 + $0x8] sm:$0xff]
    %v1455 = vld [vmem:[%s1452 + $0x10] sm:$0xff]
    %v1456 = vld [vmem:[%s1452 + $0x18] sm:$0xff]
    %v1457 = vld [vmem:[%s5 + $0xb] sm:$0x1]
    %v1458 = vlaneseq
    %v1459 = vshrl.u32 %v1458, 7
    %v1460 = vsub.s32 0, %v1459
    %v1461 = vrot.slane %v1457, %v1460
    %v1463 = vsel %vm205, %v1448, 0
    %v1466 = vsel %vm205, %v1449, 0
    %v1469 = vsel %vm205, %v1450, 0
    %v1472 = vsel %vm205, %v1451, 0
    %1474 = vmatprep.subr.mxu0 0.0
    %1475 = vmatpush1.msra.mxu0 %v1453
    %1476 = vmatprep.subr.mxu0 0.0
    %1477 = vmatpush1.msra.mxu0 %v1454
    %1478 = vmatprep.subr.mxu0 0.0
    %1479 = vmatpush1.msra.mxu0 %v1455
    %1480 = vmatprep.subr.mxu0 0.0
    %1481 = vmatpush1.msra.mxu0 %v1456
    %1482 = vmatprep.subr.mxu0 0.0
    %1483 = vmatpush1.msra.mxu0 0.0
    %1484 = vmatprep.subr.mxu0 0.0
    %1485 = vmatpush1.msra.mxu0 0.0
    %1486 = vmatprep.subr.mxu0 0.0
    %1487 = vmatpush1.msra.mxu0 0.0
    %1488 = vmatprep.subr.mxu0 0.0
    %1489 = vmatpush1.msra.mxu0 0.0
    %1490 = vmatprep.subr.mxu0 0.0
    %1491 = vmatpush1.msra.mxu0 0.0
    %1492 = vmatprep.subr.mxu0 0.0
    %1493 = vmatpush1.msra.mxu0 0.0
    %1494 = vmatprep.subr.mxu0 0.0
    %1495 = vmatpush1.msra.mxu0 0.0
    %1496 = vmatprep.subr.mxu0 0.0
    %1497 = vmatpush1.msra.mxu0 0.0
    %1498 = vmatprep.subr.mxu0 0.0
    %1499 = vmatpush1.msra.mxu0 0.0
    %1500 = vmatprep.subr.mxu0 0.0
    %1501 = vmatpush1.msra.mxu0 0.0
    %1502 = vmatprep.subr.mxu0 0.0
    %1503 = vmatpush1.msra.mxu0 0.0
    %1504 = vmatprep.subr.mxu0 0.0
    %1505 = vmatpush1.msra.mxu0 0.0
    %1506 = vmatprep.subr.mxu0 0.0
    %1507 = vmatpush1.msra.mxu0 0.0
    %1508 = vmatprep.subr.mxu0 0.0
    %1509 = vmatpush1.msra.mxu0 0.0
    %1510 = vmatprep.subr.mxu0 0.0
    %1511 = vmatpush1.msra.mxu0 0.0
    %1512 = vmatprep.subr.mxu0 0.0
    %1513 = vmatpush1.msra.mxu0 0.0
    %1514 = vmatprep.subr.mxu0 0.0
    %1515 = vmatpush1.msra.mxu0 0.0
    %1516 = vmatprep.subr.mxu0 0.0
    %1517 = vmatpush1.msra.mxu0 0.0
    %1518 = vmatprep.subr.mxu0 0.0
    %1519 = vmatpush1.msra.mxu0 0.0
    %1520 = vmatprep.subr.mxu0 0.0
    %1521 = vmatpush1.msra.mxu0 0.0
    %1522 = vmatprep.subr.mxu0 0.0
    %1523 = vmatpush1.msra.mxu0 0.0
    %1524 = vmatprep.subr.mxu0 0.0
    %1525 = vmatpush1.msra.mxu0 0.0
    %1526 = vmatprep.subr.mxu0 0.0
    %1527 = vmatpush1.msra.mxu0 0.0
    %1528 = vmatprep.subr.mxu0 0.0
    %1529 = vmatpush1.msra.mxu0 0.0
    %1530 = vmatprep.subr.mxu0 0.0
    %1531 = vmatpush1.msra.mxu0 0.0
    %1532 = vmatprep.subr.mxu0 0.0
    %1533 = vmatpush1.msra.mxu0 0.0
    %1534 = vmatprep.subr.mxu0 0.0
    %1535 = vmatpush1.msra.mxu0 0.0
    %1536 = vmatprep.subr.mxu0 0.0
    %1537 = vmatpush1.msra.mxu0 0.0
    %1538 = vmatprep.mubr.f32.mxu0 0.0
    %1539 = vmatmul.mubr.f32.gmra.mrb[0].mxu0 %v1463
    %v1540 = vpop.f32.mrb[0].mxu0
    %v1541 = vadd.f32 %v1461, %v1540
    %v1542 = vpop.f32.mrb[0].mxu0
    %1543 = vmatprep.mubr.f32.mxu0 0.0
    %1544 = vmatmul.mubr.f32.gmra.mrb[0].mxu0 %v1466
    %v1545 = vpop.f32.mrb[0].mxu0
    %v1546 = vadd.f32 %v1461, %v1545
    %v1547 = vpop.f32.mrb[0].mxu0
    %1548 = vmatprep.mubr.f32.mxu0 0.0
    %1549 = vmatmul.mubr.f32.gmra.mrb[0].mxu0 %v1469
    %v1550 = vpop.f32.mrb[0].mxu0
    %v1551 = vadd.f32 %v1461, %v1550
    %v1552 = vpop.f32.mrb[0].mxu0
    %1553 = vmatprep.mubr.f32.mxu0 0.0
    %1554 = vmatmul.mubr.f32.gmra.mrb[0].mxu0 %v1472
    %v1555 = vpop.f32.mrb[0].mxu0
    %v1556 = vadd.f32 %v1461, %v1555
    %v1557 = vpop.f32.mrb[0].mxu0
    %1558 = vdwg.mxu0
    %1563 = vrot.lane.b32.xlu0 %v1541, 96
    %v1564 = vpop.permute.xlu0 %1563
    %1565 = vrot.lane.b32.xlu0 %v1546, 96
    %v1566 = vpop.permute.xlu0 %1565
    %1567 = vrot.lane.b32.xlu0 %v1551, 96
    %v1568 = vpop.permute.xlu0 %1567
    %1569 = vrot.lane.b32.xlu0 %v1556, 96
    %v1570 = vpop.permute.xlu0 %1569
    %1575 = vxpose.xlu0.b32.start [1/16] %v1564, 128
    %1576 = vxpose.xlu0.b32.cont [2/16] %v1566, 128
    %1577 = vxpose.xlu0.b32.cont [3/16] %v1568, 128
    %1578 = vxpose.xlu0.b32.cont [4/16] %v1570, 128
    %1579 = vxpose.xlu0.b32.cont [5/16] 0.0, 128
    %1580 = vxpose.xlu0.b32.cont [6/16] 0.0, 128
    %1581 = vxpose.xlu0.b32.cont [7/16] 0.0, 128
    %1582 = vxpose.xlu0.b32.cont [8/16] 0.0, 128
    %1583 = vxpose.xlu0.b32.cont [9/16] 0.0, 128
    %1584 = vxpose.xlu0.b32.cont [10/16] 0.0, 128
    %1585 = vxpose.xlu0.b32.cont [11/16] 0.0, 128
    %1586 = vxpose.xlu0.b32.cont [12/16] 0.0, 128
    %1587 = vxpose.xlu0.b32.cont [13/16] 0.0, 128
    %1588 = vxpose.xlu0.b32.cont [14/16] 0.0, 128
    %1589 = vxpose.xlu0.b32.cont [15/16] 0.0, 128
    %1590 = vxpose.xlu0.b32.end [16/16] 0.0, 128
    %v1591 = vpop.trf.xlu0
    %v1592 = vpop.trf.xlu0
    %v1593 = vpop.trf.xlu0
    %v1594 = vpop.trf.xlu0
    %v1595 = vpop.trf.xlu0
    %v1596 = vpop.trf.xlu0
    %v1597 = vpop.trf.xlu0
    %v1598 = vpop.trf.xlu0
    %v1599 = vpop.trf.xlu0
    %v1600 = vpop.trf.xlu0
    %v1601 = vpop.trf.xlu0
    %v1602 = vpop.trf.xlu0
    %v1603 = vpop.trf.xlu0
    %v1604 = vpop.trf.xlu0
    %v1605 = vpop.trf.xlu0
    %v1606 = vpop.trf.xlu0
    %1611 = vrot.lane.b32.xlu0 %v1591, 32
    %v1612 = vpop.permute.xlu0 %1611
    %1613 = vrot.lane.b32.xlu0 %v1592, 32
    %v1614 = vpop.permute.xlu0 %1613
    %1615 = vrot.lane.b32.xlu0 %v1593, 32
    %v1616 = vpop.permute.xlu0 %1615
    %1617 = vrot.lane.b32.xlu0 %v1594, 32
    %v1618 = vpop.permute.xlu0 %1617
    %1623 = vrot.lane.b32.xlu0 %v1591, 64
    %v1624 = vpop.permute.xlu0 %1623
    %1625 = vrot.lane.b32.xlu0 %v1592, 64
    %v1626 = vpop.permute.xlu0 %1625
    %1627 = vrot.lane.b32.xlu0 %v1593, 64
    %v1628 = vpop.permute.xlu0 %1627
    %1629 = vrot.lane.b32.xlu0 %v1594, 64
    %v1630 = vpop.permute.xlu0 %1629
    %1635 = vrot.lane.b32.xlu0 %v1591, 96
    %v1636 = vpop.permute.xlu0 %1635
    %1637 = vrot.lane.b32.xlu0 %v1592, 96
    %v1638 = vpop.permute.xlu0 %1637
    %1639 = vrot.lane.b32.xlu0 %v1593, 96
    %v1640 = vpop.permute.xlu0 %1639
    %1641 = vrot.lane.b32.xlu0 %v1594, 96
    %v1642 = vpop.permute.xlu0 %1641
    %v1647 = vsel %vm205, %v1591, %v1612
    %v1648 = vsel %vm205, %v1592, %v1614
    %v1649 = vsel %vm205, %v1593, %v1616
    %v1650 = vsel %vm205, %v1594, %v1618
    %v1651 = vsel %vm497, %v1647, %v1624
    %v1652 = vsel %vm497, %v1648, %v1626
    %v1653 = vsel %vm497, %v1649, %v1628
    %v1654 = vsel %vm497, %v1650, %v1630
    %v1655 = vsel %vm502, %v1651, %v1636
    %v1656 = vsel %vm502, %v1652, %v1638
    %v1657 = vsel %vm502, %v1653, %v1640
    %v1658 = vsel %vm502, %v1654, %v1642
    %v1659 = vmul.f32 %v1655, %v275
    %v1660 = vmul.f32 %v1656, %v276
    %v1661 = vmul.f32 %v1657, %v277
    %v1662 = vmul.f32 %v1658, %v278
    %v1663 = vsel %vm205, %v1541, 0
    %v1665 = vsel %vm205, %v1546, 0
    %v1667 = vsel %vm205, %v1551, 0
    %v1669 = vsel %vm205, %v1556, 0
    %1671 = vmatprep.subr.mxu0 0.0
    %1672 = vmatpush1.msra.mxu0 %v1659
    %1673 = vmatprep.subr.mxu0 0.0
    %1674 = vmatpush1.msra.mxu0 %v1660
    %1675 = vmatprep.subr.mxu0 0.0
    %1676 = vmatpush1.msra.mxu0 %v1661
    %1677 = vmatprep.subr.mxu0 0.0
    %1678 = vmatpush1.msra.mxu0 %v1662
    %1679 = vmatprep.subr.mxu0 0.0
    %1680 = vmatpush1.msra.mxu0 0.0
    %1681 = vmatprep.subr.mxu0 0.0
    %1682 = vmatpush1.msra.mxu0 0.0
    %1683 = vmatprep.subr.mxu0 0.0
    %1684 = vmatpush1.msra.mxu0 0.0
    %1685 = vmatprep.subr.mxu0 0.0
    %1686 = vmatpush1.msra.mxu0 0.0
    %1687 = vmatprep.subr.mxu0 0.0
    %1688 = vmatpush1.msra.mxu0 0.0
    %1689 = vmatprep.subr.mxu0 0.0
    %1690 = vmatpush1.msra.mxu0 0.0
    %1691 = vmatprep.subr.mxu0 0.0
    %1692 = vmatpush1.msra.mxu0 0.0
    %1693 = vmatprep.subr.mxu0 0.0
    %1694 = vmatpush1.msra.mxu0 0.0
    %1695 = vmatprep.subr.mxu0 0.0
    %1696 = vmatpush1.msra.mxu0 0.0
    %1697 = vmatprep.subr.mxu0 0.0
    %1698 = vmatpush1.msra.mxu0 0.0
    %1699 = vmatprep.subr.mxu0 0.0
    %1700 = vmatpush1.msra.mxu0 0.0
    %1701 = vmatprep.subr.mxu0 0.0
    %1702 = vmatpush1.msra.mxu0 0.0
    %1703 = vmatprep.subr.mxu0 0.0
    %1704 = vmatpush1.msra.mxu0 0.0
    %1705 = vmatprep.subr.mxu0 0.0
    %1706 = vmatpush1.msra.mxu0 0.0
    %1707 = vmatprep.subr.mxu0 0.0
    %1708 = vmatpush1.msra.mxu0 0.0
    %1709 = vmatprep.subr.mxu0 0.0
    %1710 = vmatpush1.msra.mxu0 0.0
    %1711 = vmatprep.subr.mxu0 0.0
    %1712 = vmatpush1.msra.mxu0 0.0
    %1713 = vmatprep.subr.mxu0 0.0
    %1714 = vmatpush1.msra.mxu0 0.0
    %1715 = vmatprep.subr.mxu0 0.0
    %1716 = vmatpush1.msra.mxu0 0.0
    %1717 = vmatprep.subr.mxu0 0.0
    %1718 = vmatpush1.msra.mxu0 0.0
    %1719 = vmatprep.subr.mxu0 0.0
    %1720 = vmatpush1.msra.mxu0 0.0
    %1721 = vmatprep.subr.mxu0 0.0
    %1722 = vmatpush1.msra.mxu0 0.0
    %1723 = vmatprep.subr.mxu0 0.0
    %1724 = vmatpush1.msra.mxu0 0.0
    %1725 = vmatprep.subr.mxu0 0.0
    %1726 = vmatpush1.msra.mxu0 0.0
    %1727 = vmatprep.subr.mxu0 0.0
    %1728 = vmatpush1.msra.mxu0 0.0
    %1729 = vmatprep.subr.mxu0 0.0
    %1730 = vmatpush1.msra.mxu0 0.0
    %1731 = vmatprep.subr.mxu0 0.0
    %1732 = vmatpush1.msra.mxu0 0.0
    %1733 = vmatprep.subr.mxu0 0.0
    %1734 = vmatpush1.msra.mxu0 0.0
    %1735 = vmatprep.mubr.f32.mxu0 0.0
    %1736 = vmatmul.mubr.f32.gmra.mrb[0].mxu0 %v1663
    %v1737 = vpop.f32.mrb[0].mxu0
    %v1738 = vadd.f32 %v279, %v1737
    %v1739 = vpop.f32.mrb[0].mxu0
    %1740 = vmatprep.mubr.f32.mxu0 0.0
    %1741 = vmatmul.mubr.f32.gmra.mrb[0].mxu0 %v1665
    %v1742 = vpop.f32.mrb[0].mxu0
    %v1743 = vadd.f32 %v280, %v1742
    %v1744 = vpop.f32.mrb[0].mxu0
    %1745 = vmatprep.mubr.f32.mxu0 0.0
    %1746 = vmatmul.mubr.f32.gmra.mrb[0].mxu0 %v1667
    %v1747 = vpop.f32.mrb[0].mxu0
    %v1748 = vadd.f32 %v281, %v1747
    %v1749 = vpop.f32.mrb[0].mxu0
    %1750 = vmatprep.mubr.f32.mxu0 0.0
    %1751 = vmatmul.mubr.f32.gmra.mrb[0].mxu0 %v1669
    %v1752 = vpop.f32.mrb[0].mxu0
    %v1753 = vadd.f32 %v282, %v1752
    %v1754 = vpop.f32.mrb[0].mxu0
    %1755 = vdwg.mxu0
    %1756 = vmax.xlane.f32.xlu0 %v1738
    %v1757 = vpop.xlane.xlu0 %1756
    %1758 = vmax.xlane.f32.xlu0 %v1743
    %v1759 = vpop.xlane.xlu0 %1758
    %1760 = vmax.xlane.f32.xlu0 %v1748
    %v1761 = vpop.xlane.xlu0 %1760
    %1762 = vmax.xlane.f32.xlu0 %v1753
    %v1763 = vpop.xlane.xlu0 %1762
    %v1764 = vsub.f32 %v1738, %v1757
    %v1765 = vsub.f32 %v1743, %v1759
    %v1766 = vsub.f32 %v1748, %v1761
    %v1767 = vsub.f32 %v1753, %v1763
    %v1768 = vmul.f32 %v1764, 1.442695
    %v1769 = vpow.pop %v1768
    %v1770 = vmul.f32 %v1765, 1.442695
    %v1771 = vpow.pop %v1770
    %v1772 = vmul.f32 %v1766, 1.442695
    %v1773 = vpow.pop %v1772
    %v1774 = vmul.f32 %v1767, 1.442695
    %v1775 = vpow.pop %v1774
    %v1776 = vmul.f32 %v1541, %v641
    %v1777 = vmul.f32 %v1546, %v643
    %v1778 = vmul.f32 %v1551, %v645
    %v1779 = vmul.f32 %v1556, %v647
    %v1780 = vmul.f32 %v1541, %v649
    %v1781 = vmul.f32 %v1546, %v651
    %v1782 = vmul.f32 %v1551, %v653
    %v1783 = vmul.f32 %v1556, %v655
    %v1784 = vmul.f32 %v1541, %v657
    %v1785 = vmul.f32 %v1546, %v659
    %v1786 = vmul.f32 %v1551, %v661
    %v1787 = vmul.f32 %v1556, %v663
    %v1788 = vmul.f32 %v1541, %v665
    %v1789 = vmul.f32 %v1546, %v667
    %v1790 = vmul.f32 %v1551, %v669
    %v1791 = vmul.f32 %v1556, %v671
    %1808 = vrot.lane.b32.xlu0 %v1776, 64
    %v1809 = vpop.permute.xlu0 %1808
    %1810 = vrot.lane.b32.xlu0 %v1777, 64
    %v1811 = vpop.permute.xlu0 %1810
    %1812 = vrot.lane.b32.xlu0 %v1778, 64
    %v1813 = vpop.permute.xlu0 %1812
    %1814 = vrot.lane.b32.xlu0 %v1779, 64
    %v1815 = vpop.permute.xlu0 %1814
    %1816 = vrot.lane.b32.xlu0 %v1780, 64
    %v1817 = vpop.permute.xlu0 %1816
    %1818 = vrot.lane.b32.xlu0 %v1781, 64
    %v1819 = vpop.permute.xlu0 %1818
    %1820 = vrot.lane.b32.xlu0 %v1782, 64
    %v1821 = vpop.permute.xlu0 %1820
    %1822 = vrot.lane.b32.xlu0 %v1783, 64
    %v1823 = vpop.permute.xlu0 %1822
    %1824 = vrot.lane.b32.xlu0 %v1784, 64
    %v1825 = vpop.permute.xlu0 %1824
    %1826 = vrot.lane.b32.xlu0 %v1785, 64
    %v1827 = vpop.permute.xlu0 %1826
    %1828 = vrot.lane.b32.xlu0 %v1786, 64
    %v1829 = vpop.permute.xlu0 %1828
    %1830 = vrot.lane.b32.xlu0 %v1787, 64
    %v1831 = vpop.permute.xlu0 %1830
    %1832 = vrot.lane.b32.xlu0 %v1788, 64
    %v1833 = vpop.permute.xlu0 %1832
    %1834 = vrot.lane.b32.xlu0 %v1789, 64
    %v1835 = vpop.permute.xlu0 %1834
    %1836 = vrot.lane.b32.xlu0 %v1790, 64
    %v1837 = vpop.permute.xlu0 %1836
    %1838 = vrot.lane.b32.xlu0 %v1791, 64
    %v1839 = vpop.permute.xlu0 %1838
    %1856 = vmatprep.subr.mxu0 0.0
    %1857 = vmatpush1.msra.mxu0 %v1809
    %1858 = vmatprep.subr.mxu0 0.0
    %1859 = vmatpush1.msra.mxu0 %v1811
    %1860 = vmatprep.subr.mxu0 0.0
    %1861 = vmatpush1.msra.mxu0 %v1813
    %1862 = vmatprep.subr.mxu0 0.0
    %1863 = vmatpush1.msra.mxu0 %v1815
    %1864 = vmatprep.subr.mxu0 0.0
    %1865 = vmatpush1.msra.mxu0 %v1817
    %1866 = vmatprep.subr.mxu0 0.0
    %1867 = vmatpush1.msra.mxu0 %v1819
    %1868 = vmatprep.subr.mxu0 0.0
    %1869 = vmatpush1.msra.mxu0 %v1821
    %1870 = vmatprep.subr.mxu0 0.0
    %1871 = vmatpush1.msra.mxu0 %v1823
    %1872 = vmatprep.subr.mxu0 0.0
    %1873 = vmatpush1.msra.mxu0 %v1825
    %1874 = vmatprep.subr.mxu0 0.0
    %1875 = vmatpush1.msra.mxu0 %v1827
    %1876 = vmatprep.subr.mxu0 0.0
    %1877 = vmatpush1.msra.mxu0 %v1829
    %1878 = vmatprep.subr.mxu0 0.0
    %1879 = vmatpush1.msra.mxu0 %v1831
    %1880 = vmatprep.subr.mxu0 0.0
    %1881 = vmatpush1.msra.mxu0 %v1833
    %1882 = vmatprep.subr.mxu0 0.0
    %1883 = vmatpush1.msra.mxu0 %v1835
    %1884 = vmatprep.subr.mxu0 0.0
    %1885 = vmatpush1.msra.mxu0 %v1837
    %1886 = vmatprep.subr.mxu0 0.0
    %1887 = vmatpush1.msra.mxu0 %v1839
    %1888 = vmatprep.subr.mxu0 0.0
    %1889 = vmatpush1.msra.mxu0 0.0
    %1890 = vmatprep.subr.mxu0 0.0
    %1891 = vmatpush1.msra.mxu0 0.0
    %1892 = vmatprep.subr.mxu0 0.0
    %1893 = vmatpush1.msra.mxu0 0.0
    %1894 = vmatprep.subr.mxu0 0.0
    %1895 = vmatpush1.msra.mxu0 0.0
    %1896 = vmatprep.subr.mxu0 0.0
    %1897 = vmatpush1.msra.mxu0 0.0
    %1898 = vmatprep.subr.mxu0 0.0
    %1899 = vmatpush1.msra.mxu0 0.0
    %1900 = vmatprep.subr.mxu0 0.0
    %1901 = vmatpush1.msra.mxu0 0.0
    %1902 = vmatprep.subr.mxu0 0.0
    %1903 = vmatpush1.msra.mxu0 0.0
    %1904 = vmatprep.subr.mxu0 0.0
    %1905 = vmatpush1.msra.mxu0 0.0
    %1906 = vmatprep.subr.mxu0 0.0
    %1907 = vmatpush1.msra.mxu0 0.0
    %1908 = vmatprep.subr.mxu0 0.0
    %1909 = vmatpush1.msra.mxu0 0.0
    %1910 = vmatprep.subr.mxu0 0.0
    %1911 = vmatpush1.msra.mxu0 0.0
    %1912 = vmatprep.subr.mxu0 0.0
    %1913 = vmatpush1.msra.mxu0 0.0
    %1914 = vmatprep.subr.mxu0 0.0
    %1915 = vmatpush1.msra.mxu0 0.0
    %1916 = vmatprep.subr.mxu0 0.0
    %1917 = vmatpush1.msra.mxu0 0.0
    %1918 = vmatprep.subr.mxu0 0.0
    %1919 = vmatpush1.msra.mxu0 0.0
    %1920 = vmatprep.mubr.f32.mxu0 0.0
    %1921 = vmatmul.mubr.f32.gmra.mrb[0].mxu0 %v1769
    %v1922 = vpop.f32.mrb[0].mxu0
    %v1923 = vadd.f32 0.0, %v1922
    %v1924 = vpop.f32.mrb[0].mxu0
    %1925 = vmatprep.mubr.f32.mxu0 0.0
    %1926 = vmatmul.mubr.f32.gmra.mrb[0].mxu0 %v1771
    %v1927 = vpop.f32.mrb[0].mxu0
    %v1928 = vadd.f32 0.0, %v1927
    %v1929 = vpop.f32.mrb[0].mxu0
    %1930 = vmatprep.mubr.f32.mxu0 0.0
    %1931 = vmatmul.mubr.f32.gmra.mrb[0].mxu0 %v1773
    %v1932 = vpop.f32.mrb[0].mxu0
    %v1933 = vadd.f32 0.0, %v1932
    %v1934 = vpop.f32.mrb[0].mxu0
    %1935 = vmatprep.mubr.f32.mxu0 0.0
    %1936 = vmatmul.mubr.f32.gmra.mrb[0].mxu0 %v1775
    %v1937 = vpop.f32.mrb[0].mxu0
    %v1938 = vadd.f32 0.0, %v1937
    %v1939 = vpop.f32.mrb[0].mxu0
    %1940 = vdwg.mxu0
    %1941 = vmatprep.subr.mxu0 0.0
    %1942 = vmatpush1.msra.mxu0 %v283
    %1943 = vmatprep.subr.mxu0 0.0
    %1944 = vmatpush1.msra.mxu0 %v284
    %1945 = vmatprep.subr.mxu0 0.0
    %1946 = vmatpush1.msra.mxu0 %v285
    %1947 = vmatprep.subr.mxu0 0.0
    %1948 = vmatpush1.msra.mxu0 %v286
    %1949 = vmatprep.subr.mxu0 0.0
    %1950 = vmatpush1.msra.mxu0 %v287
    %1951 = vmatprep.subr.mxu0 0.0
    %1952 = vmatpush1.msra.mxu0 %v288
    %1953 = vmatprep.subr.mxu0 0.0
    %1954 = vmatpush1.msra.mxu0 %v289
    %1955 = vmatprep.subr.mxu0 0.0
    %1956 = vmatpush1.msra.mxu0 %v290
    %1957 = vmatprep.subr.mxu0 0.0
    %1958 = vmatpush1.msra.mxu0 %v291
    %1959 = vmatprep.subr.mxu0 0.0
    %1960 = vmatpush1.msra.mxu0 %v292
    %1961 = vmatprep.subr.mxu0 0.0
    %1962 = vmatpush1.msra.mxu0 %v293
    %1963 = vmatprep.subr.mxu0 0.0
    %1964 = vmatpush1.msra.mxu0 %v294
    %1965 = vmatprep.subr.mxu0 0.0
    %1966 = vmatpush1.msra.mxu0 %v295
    %1967 = vmatprep.subr.mxu0 0.0
    %1968 = vmatpush1.msra.mxu0 %v296
    %1969 = vmatprep.subr.mxu0 0.0
    %1970 = vmatpush1.msra.mxu0 %v297
    %1971 = vmatprep.subr.mxu0 0.0
    %1972 = vmatpush1.msra.mxu0 %v298
    %1973 = vmatprep.subr.mxu0 0.0
    %1974 = vmatpush1.msra.mxu0 0.0
    %1975 = vmatprep.subr.mxu0 0.0
    %1976 = vmatpush1.msra.mxu0 0.0
    %1977 = vmatprep.subr.mxu0 0.0
    %1978 = vmatpush1.msra.mxu0 0.0
    %1979 = vmatprep.subr.mxu0 0.0
    %1980 = vmatpush1.msra.mxu0 0.0
    %1981 = vmatprep.subr.mxu0 0.0
    %1982 = vmatpush1.msra.mxu0 0.0
    %1983 = vmatprep.subr.mxu0 0.0
    %1984 = vmatpush1.msra.mxu0 0.0
    %1985 = vmatprep.subr.mxu0 0.0
    %1986 = vmatpush1.msra.mxu0 0.0
    %1987 = vmatprep.subr.mxu0 0.0
    %1988 = vmatpush1.msra.mxu0 0.0
    %1989 = vmatprep.subr.mxu0 0.0
    %1990 = vmatpush1.msra.mxu0 0.0
    %1991 = vmatprep.subr.mxu0 0.0
    %1992 = vmatpush1.msra.mxu0 0.0
    %1993 = vmatprep.subr.mxu0 0.0
    %1994 = vmatpush1.msra.mxu0 0.0
    %1995 = vmatprep.subr.mxu0 0.0
    %1996 = vmatpush1.msra.mxu0 0.0
    %1997 = vmatprep.subr.mxu0 0.0
    %1998 = vmatpush1.msra.mxu0 0.0
    %1999 = vmatprep.subr.mxu0 0.0
    %2000 = vmatpush1.msra.mxu0 0.0
    %2001 = vmatprep.subr.mxu0 0.0
    %2002 = vmatpush1.msra.mxu0 0.0
    %2003 = vmatprep.subr.mxu0 0.0
    %2004 = vmatpush1.msra.mxu0 0.0
    %2005 = vmatprep.mubr.f32.mxu0 0.0
    %2006 = vmatmul.mubr.f32.gmra.mrb[0].mxu0 %v1769
    %v2007 = vpop.f32.mrb[0].mxu0
    %v2008 = vadd.f32 0.0, %v2007
    %v2009 = vpop.f32.mrb[0].mxu0
    %2010 = vmatprep.mubr.f32.mxu0 0.0
    %2011 = vmatmul.mubr.f32.gmra.mrb[0].mxu0 %v1771
    %v2012 = vpop.f32.mrb[0].mxu0
    %v2013 = vadd.f32 0.0, %v2012
    %v2014 = vpop.f32.mrb[0].mxu0
    %2015 = vmatprep.mubr.f32.mxu0 0.0
    %2016 = vmatmul.mubr.f32.gmra.mrb[0].mxu0 %v1773
    %v2017 = vpop.f32.mrb[0].mxu0
    %v2018 = vadd.f32 0.0, %v2017
    %v2019 = vpop.f32.mrb[0].mxu0
    %2020 = vmatprep.mubr.f32.mxu0 0.0
    %2021 = vmatmul.mubr.f32.gmra.mrb[0].mxu0 %v1775
    %v2022 = vpop.f32.mrb[0].mxu0
    %v2023 = vadd.f32 0.0, %v2022
    %v2024 = vpop.f32.mrb[0].mxu0
    %2025 = vdwg.mxu0
    %v2026 = vrcp.pop %v2008
    %v2027 = vrcp.pop %v2013
    %v2028 = vrcp.pop %v2018
    %v2029 = vrcp.pop %v2023
    %v2030 = vmul.f32 %v1923, %v2026
    %v2031 = vmul.f32 %v1928, %v2027
    %v2032 = vmul.f32 %v1933, %v2028
    %v2033 = vmul.f32 %v1938, %v2029
    %s2034 = scalar_lea.vmem %s4, 96
    %v2035 = vld [vmem:[%s2034] sm:$0xff]
    %v2036 = vld [vmem:[%s2034 + $0x8] sm:$0xff]
    %v2037 = vld [vmem:[%s2034 + $0x10] sm:$0xff]
    %v2038 = vld [vmem:[%s2034 + $0x18] sm:$0xff]
    %v2039 = vld [vmem:[%s5 + $0xc] sm:$0x1]
    %v2040 = vlaneseq
    %v2041 = vshrl.u32 %v2040, 7
    %v2042 = vsub.s32 0, %v2041
    %v2043 = vrot.slane %v2039, %v2042
    %v2045 = vsel %vm205, %v2030, 0
    %v2048 = vsel %vm205, %v2031, 0
    %v2051 = vsel %vm205, %v2032, 0
    %v2054 = vsel %vm205, %v2033, 0
    %2056 = vmatprep.subr.mxu0 0.0
    %2057 = vmatpush1.msra.mxu0 %v2035
    %2058 = vmatprep.subr.mxu0 0.0
    %2059 = vmatpush1.msra.mxu0 %v2036
    %2060 = vmatprep.subr.mxu0 0.0
    %2061 = vmatpush1.msra.mxu0 %v2037
    %2062 = vmatprep.subr.mxu0 0.0
    %2063 = vmatpush1.msra.mxu0 %v2038
    %2064 = vmatprep.subr.mxu0 0.0
    %2065 = vmatpush1.msra.mxu0 0.0
    %2066 = vmatprep.subr.mxu0 0.0
    %2067 = vmatpush1.msra.mxu0 0.0
    %2068 = vmatprep.subr.mxu0 0.0
    %2069 = vmatpush1.msra.mxu0 0.0
    %2070 = vmatprep.subr.mxu0 0.0
    %2071 = vmatpush1.msra.mxu0 0.0
    %2072 = vmatprep.subr.mxu0 0.0
    %2073 = vmatpush1.msra.mxu0 0.0
    %2074 = vmatprep.subr.mxu0 0.0
    %2075 = vmatpush1.msra.mxu0 0.0
    %2076 = vmatprep.subr.mxu0 0.0
    %2077 = vmatpush1.msra.mxu0 0.0
    %2078 = vmatprep.subr.mxu0 0.0
    %2079 = vmatpush1.msra.mxu0 0.0
    %2080 = vmatprep.subr.mxu0 0.0
    %2081 = vmatpush1.msra.mxu0 0.0
    %2082 = vmatprep.subr.mxu0 0.0
    %2083 = vmatpush1.msra.mxu0 0.0
    %2084 = vmatprep.subr.mxu0 0.0
    %2085 = vmatpush1.msra.mxu0 0.0
    %2086 = vmatprep.subr.mxu0 0.0
    %2087 = vmatpush1.msra.mxu0 0.0
    %2088 = vmatprep.subr.mxu0 0.0
    %2089 = vmatpush1.msra.mxu0 0.0
    %2090 = vmatprep.subr.mxu0 0.0
    %2091 = vmatpush1.msra.mxu0 0.0
    %2092 = vmatprep.subr.mxu0 0.0
    %2093 = vmatpush1.msra.mxu0 0.0
    %2094 = vmatprep.subr.mxu0 0.0
    %2095 = vmatpush1.msra.mxu0 0.0
    %2096 = vmatprep.subr.mxu0 0.0
    %2097 = vmatpush1.msra.mxu0 0.0
    %2098 = vmatprep.subr.mxu0 0.0
    %2099 = vmatpush1.msra.mxu0 0.0
    %2100 = vmatprep.subr.mxu0 0.0
    %2101 = vmatpush1.msra.mxu0 0.0
    %2102 = vmatprep.subr.mxu0 0.0
    %2103 = vmatpush1.msra.mxu0 0.0
    %2104 = vmatprep.subr.mxu0 0.0
    %2105 = vmatpush1.msra.mxu0 0.0
    %2106 = vmatprep.subr.mxu0 0.0
    %2107 = vmatpush1.msra.mxu0 0.0
    %2108 = vmatprep.subr.mxu0 0.0
    %2109 = vmatpush1.msra.mxu0 0.0
    %2110 = vmatprep.subr.mxu0 0.0
    %2111 = vmatpush1.msra.mxu0 0.0
    %2112 = vmatprep.subr.mxu0 0.0
    %2113 = vmatpush1.msra.mxu0 0.0
    %2114 = vmatprep.subr.mxu0 0.0
    %2115 = vmatpush1.msra.mxu0 0.0
    %2116 = vmatprep.subr.mxu0 0.0
    %2117 = vmatpush1.msra.mxu0 0.0
    %2118 = vmatprep.subr.mxu0 0.0
    %2119 = vmatpush1.msra.mxu0 0.0
    %2120 = vmatprep.mubr.f32.mxu0 0.0
    %2121 = vmatmul.mubr.f32.gmra.mrb[0].mxu0 %v2045
    %v2122 = vpop.f32.mrb[0].mxu0
    %v2123 = vadd.f32 %v2043, %v2122
    %v2124 = vpop.f32.mrb[0].mxu0
    %2125 = vmatprep.mubr.f32.mxu0 0.0
    %2126 = vmatmul.mubr.f32.gmra.mrb[0].mxu0 %v2048
    %v2127 = vpop.f32.mrb[0].mxu0
    %v2128 = vadd.f32 %v2043, %v2127
    %v2129 = vpop.f32.mrb[0].mxu0
    %2130 = vmatprep.mubr.f32.mxu0 0.0
    %2131 = vmatmul.mubr.f32.gmra.mrb[0].mxu0 %v2051
    %v2132 = vpop.f32.mrb[0].mxu0
    %v2133 = vadd.f32 %v2043, %v2132
    %v2134 = vpop.f32.mrb[0].mxu0
    %2135 = vmatprep.mubr.f32.mxu0 0.0
    %2136 = vmatmul.mubr.f32.gmra.mrb[0].mxu0 %v2054
    %v2137 = vpop.f32.mrb[0].mxu0
    %v2138 = vadd.f32 %v2043, %v2137
    %v2139 = vpop.f32.mrb[0].mxu0
    %2140 = vdwg.mxu0
    %v2141 = vadd.f32 %v1448, %v2123
    %v2142 = vadd.f32 %v1449, %v2128
    %v2143 = vadd.f32 %v1450, %v2133
    %v2144 = vadd.f32 %v1451, %v2138
    %v2145 = vld [vmem:[%s5 + $0xd] sm:$0x1]
    %v2146 = vld [vmem:[%s5 + $0xe] sm:$0x1]
    %v2147 = vsel %vm205, %v2141, 0.0
    %2148 = vadd.xlane.f32.xlu0 %v2147
    %v2149 = vpop.xlane.xlu0 %2148
    %v2150 = vsel %vm205, %v2142, 0.0
    %2151 = vadd.xlane.f32.xlu0 %v2150
    %v2152 = vpop.xlane.xlu0 %2151
    %v2153 = vsel %vm205, %v2143, 0.0
    %2154 = vadd.xlane.f32.xlu0 %v2153
    %v2155 = vpop.xlane.xlu0 %2154
    %v2156 = vsel %vm205, %v2144, 0.0
    %2157 = vadd.xlane.f32.xlu0 %v2156
    %v2158 = vpop.xlane.xlu0 %2157
    %v2159 = vmul.f32 %v2149, %v218
    %v2160 = vmul.f32 %v2152, %v218
    %v2161 = vmul.f32 %v2155, %v218
    %v2162 = vmul.f32 %v2158, %v218
    %v2163 = vsub.f32 %v2141, %v2159
    %v2164 = vsub.f32 %v2142, %v2160
    %v2165 = vsub.f32 %v2143, %v2161
    %v2166 = vsub.f32 %v2144, %v2162
    %v2167 = vmul.f32 %v2163, %v2163
    %v2168 = vmul.f32 %v2164, %v2164
    %v2169 = vmul.f32 %v2165, %v2165
    %v2170 = vmul.f32 %v2166, %v2166
    %v2171 = vsel %vm205, %v2167, 0.0
    %2172 = vadd.xlane.f32.xlu0 %v2171
    %v2173 = vpop.xlane.xlu0 %2172
    %v2174 = vsel %vm205, %v2168, 0.0
    %2175 = vadd.xlane.f32.xlu0 %v2174
    %v2176 = vpop.xlane.xlu0 %2175
    %v2177 = vsel %vm205, %v2169, 0.0
    %2178 = vadd.xlane.f32.xlu0 %v2177
    %v2179 = vpop.xlane.xlu0 %2178
    %v2180 = vsel %vm205, %v2170, 0.0
    %2181 = vadd.xlane.f32.xlu0 %v2180
    %v2182 = vpop.xlane.xlu0 %2181
    %v2183 = vmul.f32 %v2173, %v218
    %v2184 = vmul.f32 %v2176, %v218
    %v2185 = vmul.f32 %v2179, %v218
    %v2186 = vmul.f32 %v2182, %v218
    %v2187 = vadd.f32 %v2183, 1e-05
    %v2188 = vadd.f32 %v2184, 1e-05
    %v2189 = vadd.f32 %v2185, 1e-05
    %v2190 = vadd.f32 %v2186, 1e-05
    %v2191 = vrsqrt.pop %v2187
    %v2192 = vrsqrt.pop %v2188
    %v2193 = vrsqrt.pop %v2189
    %v2194 = vrsqrt.pop %v2190
    %v2195 = vmul.f32 %v2163, %v2191
    %v2196 = vmul.f32 %v2164, %v2192
    %v2197 = vmul.f32 %v2165, %v2193
    %v2198 = vmul.f32 %v2166, %v2194
    %v2199 = vlaneseq
    %v2200 = vshrl.u32 %v2199, 7
    %v2201 = vsub.s32 0, %v2200
    %v2202 = vrot.slane %v2145, %v2201
    %v2203 = vmul.f32 %v2195, %v2202
    %v2204 = vmul.f32 %v2196, %v2202
    %v2205 = vmul.f32 %v2197, %v2202
    %v2206 = vmul.f32 %v2198, %v2202
    %v2207 = vlaneseq
    %v2208 = vshrl.u32 %v2207, 7
    %v2209 = vsub.s32 0, %v2208
    %v2210 = vrot.slane %v2146, %v2209
    %v2211 = vadd.f32 %v2203, %v2210
    %v2212 = vadd.f32 %v2204, %v2210
    %v2213 = vadd.f32 %v2205, %v2210
    %v2214 = vadd.f32 %v2206, %v2210
    %s2215 = scalar_lea.vmem %s3, 32
    %v2216 = vld [vmem:[%s2215] sm:$0xff]
    %v2217 = vld [vmem:[%s2215 + $0x8] sm:$0xff]
    %v2218 = vld [vmem:[%s2215 + $0x10] sm:$0xff]
    %v2219 = vld [vmem:[%s2215 + $0x18] sm:$0xff]
    %v2220 = vld [vmem:[%s5 + $0xf] sm:$0x1]
    %v2221 = vlaneseq
    %v2222 = vshrl.u32 %v2221, 7
    %v2223 = vsub.s32 0, %v2222
    %v2224 = vrot.slane %v2220, %v2223
    %v2226 = vsel %vm205, %v2211, 0
    %v2229 = vsel %vm205, %v2212, 0
    %v2232 = vsel %vm205, %v2213, 0
    %v2235 = vsel %vm205, %v2214, 0
    %2237 = vmatprep.subr.mxu0 0.0
    %2238 = vmatpush1.msra.mxu0 %v2216
    %2239 = vmatprep.subr.mxu0 0.0
    %2240 = vmatpush1.msra.mxu0 %v2217
    %2241 = vmatprep.subr.mxu0 0.0
    %2242 = vmatpush1.msra.mxu0 %v2218
    %2243 = vmatprep.subr.mxu0 0.0
    %2244 = vmatpush1.msra.mxu0 %v2219
    %2245 = vmatprep.subr.mxu0 0.0
    %2246 = vmatpush1.msra.mxu0 0.0
    %2247 = vmatprep.subr.mxu0 0.0
    %2248 = vmatpush1.msra.mxu0 0.0
    %2249 = vmatprep.subr.mxu0 0.0
    %2250 = vmatpush1.msra.mxu0 0.0
    %2251 = vmatprep.subr.mxu0 0.0
    %2252 = vmatpush1.msra.mxu0 0.0
    %2253 = vmatprep.subr.mxu0 0.0
    %2254 = vmatpush1.msra.mxu0 0.0
    %2255 = vmatprep.subr.mxu0 0.0
    %2256 = vmatpush1.msra.mxu0 0.0
    %2257 = vmatprep.subr.mxu0 0.0
    %2258 = vmatpush1.msra.mxu0 0.0
    %2259 = vmatprep.subr.mxu0 0.0
    %2260 = vmatpush1.msra.mxu0 0.0
    %2261 = vmatprep.subr.mxu0 0.0
    %2262 = vmatpush1.msra.mxu0 0.0
    %2263 = vmatprep.subr.mxu0 0.0
    %2264 = vmatpush1.msra.mxu0 0.0
    %2265 = vmatprep.subr.mxu0 0.0
    %2266 = vmatpush1.msra.mxu0 0.0
    %2267 = vmatprep.subr.mxu0 0.0
    %2268 = vmatpush1.msra.mxu0 0.0
    %2269 = vmatprep.subr.mxu0 0.0
    %2270 = vmatpush1.msra.mxu0 0.0
    %2271 = vmatprep.subr.mxu0 0.0
    %2272 = vmatpush1.msra.mxu0 0.0
    %2273 = vmatprep.subr.mxu0 0.0
    %2274 = vmatpush1.msra.mxu0 0.0
    %2275 = vmatprep.subr.mxu0 0.0
    %2276 = vmatpush1.msra.mxu0 0.0
    %2277 = vmatprep.subr.mxu0 0.0
    %2278 = vmatpush1.msra.mxu0 0.0
    %2279 = vmatprep.subr.mxu0 0.0
    %2280 = vmatpush1.msra.mxu0 0.0
    %2281 = vmatprep.subr.mxu0 0.0
    %2282 = vmatpush1.msra.mxu0 0.0
    %2283 = vmatprep.subr.mxu0 0.0
    %2284 = vmatpush1.msra.mxu0 0.0
    %2285 = vmatprep.subr.mxu0 0.0
    %2286 = vmatpush1.msra.mxu0 0.0
    %2287 = vmatprep.subr.mxu0 0.0
    %2288 = vmatpush1.msra.mxu0 0.0
    %2289 = vmatprep.subr.mxu0 0.0
    %2290 = vmatpush1.msra.mxu0 0.0
    %2291 = vmatprep.subr.mxu0 0.0
    %2292 = vmatpush1.msra.mxu0 0.0
    %2293 = vmatprep.subr.mxu0 0.0
    %2294 = vmatpush1.msra.mxu0 0.0
    %2295 = vmatprep.subr.mxu0 0.0
    %2296 = vmatpush1.msra.mxu0 0.0
    %2297 = vmatprep.subr.mxu0 0.0
    %2298 = vmatpush1.msra.mxu0 0.0
    %2299 = vmatprep.subr.mxu0 0.0
    %2300 = vmatpush1.msra.mxu0 0.0
    %2301 = vmatprep.mubr.f32.mxu0 0.0
    %2302 = vmatmul.mubr.f32.gmra.mrb[0].mxu0 %v2226
    %v2303 = vpop.f32.mrb[0].mxu0
    %v2304 = vadd.f32 %v2224, %v2303
    %v2305 = vpop.f32.mrb[0].mxu0
    %2306 = vmatprep.mubr.f32.mxu0 0.0
    %2307 = vmatmul.mubr.f32.gmra.mrb[0].mxu0 %v2229
    %v2308 = vpop.f32.mrb[0].mxu0
    %v2309 = vadd.f32 %v2224, %v2308
    %v2310 = vpop.f32.mrb[0].mxu0
    %2311 = vmatprep.mubr.f32.mxu0 0.0
    %2312 = vmatmul.mubr.f32.gmra.mrb[0].mxu0 %v2232
    %v2313 = vpop.f32.mrb[0].mxu0
    %v2314 = vadd.f32 %v2224, %v2313
    %v2315 = vpop.f32.mrb[0].mxu0
    %2316 = vmatprep.mubr.f32.mxu0 0.0
    %2317 = vmatmul.mubr.f32.gmra.mrb[0].mxu0 %v2235
    %v2318 = vpop.f32.mrb[0].mxu0
    %v2319 = vadd.f32 %v2224, %v2318
    %v2320 = vpop.f32.mrb[0].mxu0
    %2321 = vdwg.mxu0
    %v2322 = vmul.f32 %v2304, 0.5
    %v2323 = vmul.f32 %v2309, 0.5
    %v2324 = vmul.f32 %v2314, 0.5
    %v2325 = vmul.f32 %v2319, 0.5
    %v2326 = vmul.f32 %v2304, 0.044715
    %v2327 = vmul.f32 %v2309, 0.044715
    %v2328 = vmul.f32 %v2314, 0.044715
    %v2329 = vmul.f32 %v2319, 0.044715
    %v2330 = vmul.f32 %v2326, %v2304
    %v2331 = vmul.f32 %v2327, %v2309
    %v2332 = vmul.f32 %v2328, %v2314
    %v2333 = vmul.f32 %v2329, %v2319
    %v2334 = vmul.f32 %v2330, %v2304
    %v2335 = vmul.f32 %v2331, %v2309
    %v2336 = vmul.f32 %v2332, %v2314
    %v2337 = vmul.f32 %v2333, %v2319
    %v2338 = vadd.f32 %v2304, %v2334
    %v2339 = vadd.f32 %v2309, %v2335
    %v2340 = vadd.f32 %v2314, %v2336
    %v2341 = vadd.f32 %v2319, %v2337
    %v2342 = vmul.f32 %v2338, 0.7978846
    %v2343 = vmul.f32 %v2339, 0.7978846
    %v2344 = vmul.f32 %v2340, 0.7978846
    %v2345 = vmul.f32 %v2341, 0.7978846
    %v2346 = vtanh.pop %v2342
    %v2347 = vtanh.pop %v2343
    %v2348 = vtanh.pop %v2344
    %v2349 = vtanh.pop %v2345
    %v2350 = vadd.f32 %v2346, 1.0
    %v2351 = vadd.f32 %v2347, 1.0
    %v2352 = vadd.f32 %v2348, 1.0
    %v2353 = vadd.f32 %v2349, 1.0
    %v2354 = vmul.f32 %v2322, %v2350
    %v2355 = vmul.f32 %v2323, %v2351
    %v2356 = vmul.f32 %v2324, %v2352
    %v2357 = vmul.f32 %v2325, %v2353
    %v2358 = vld [vmem:[%s2034 + $0x20] sm:$0xff]
    %v2359 = vld [vmem:[%s2034 + $0x28] sm:$0xff]
    %v2360 = vld [vmem:[%s2034 + $0x30] sm:$0xff]
    %v2361 = vld [vmem:[%s2034 + $0x38] sm:$0xff]
    %v2362 = vld [vmem:[%s2034 + $0x40] sm:$0xff]
    %v2363 = vld [vmem:[%s2034 + $0x48] sm:$0xff]
    %v2364 = vld [vmem:[%s2034 + $0x50] sm:$0xff]
    %v2365 = vld [vmem:[%s2034 + $0x58] sm:$0xff]
    %v2366 = vld [vmem:[%s5 + $0x10] sm:$0x1]
    %v2367 = vlaneseq
    %v2368 = vshrl.u32 %v2367, 7
    %v2369 = vsub.s32 0, %v2368
    %v2370 = vrot.slane %v2366, %v2369
    %v2372 = vsel %vm497, %v2354, 0
    %v2375 = vsel %vm497, %v2355, 0
    %v2378 = vsel %vm497, %v2356, 0
    %v2381 = vsel %vm497, %v2357, 0
    %2383 = vmatprep.subr.mxu0 0.0
    %2384 = vmatpush1.msra.mxu0 %v2358
    %2385 = vmatprep.subr.mxu0 0.0
    %2386 = vmatpush1.msra.mxu0 %v2359
    %2387 = vmatprep.subr.mxu0 0.0
    %2388 = vmatpush1.msra.mxu0 %v2360
    %2389 = vmatprep.subr.mxu0 0.0
    %2390 = vmatpush1.msra.mxu0 %v2361
    %2391 = vmatprep.subr.mxu0 0.0
    %2392 = vmatpush1.msra.mxu0 %v2362
    %2393 = vmatprep.subr.mxu0 0.0
    %2394 = vmatpush1.msra.mxu0 %v2363
    %2395 = vmatprep.subr.mxu0 0.0
    %2396 = vmatpush1.msra.mxu0 %v2364
    %2397 = vmatprep.subr.mxu0 0.0
    %2398 = vmatpush1.msra.mxu0 %v2365
    %2399 = vmatprep.subr.mxu0 0.0
    %2400 = vmatpush1.msra.mxu0 0.0
    %2401 = vmatprep.subr.mxu0 0.0
    %2402 = vmatpush1.msra.mxu0 0.0
    %2403 = vmatprep.subr.mxu0 0.0
    %2404 = vmatpush1.msra.mxu0 0.0
    %2405 = vmatprep.subr.mxu0 0.0
    %2406 = vmatpush1.msra.mxu0 0.0
    %2407 = vmatprep.subr.mxu0 0.0
    %2408 = vmatpush1.msra.mxu0 0.0
    %2409 = vmatprep.subr.mxu0 0.0
    %2410 = vmatpush1.msra.mxu0 0.0
    %2411 = vmatprep.subr.mxu0 0.0
    %2412 = vmatpush1.msra.mxu0 0.0
    %2413 = vmatprep.subr.mxu0 0.0
    %2414 = vmatpush1.msra.mxu0 0.0
    %2415 = vmatprep.subr.mxu0 0.0
    %2416 = vmatpush1.msra.mxu0 0.0
    %2417 = vmatprep.subr.mxu0 0.0
    %2418 = vmatpush1.msra.mxu0 0.0
    %2419 = vmatprep.subr.mxu0 0.0
    %2420 = vmatpush1.msra.mxu0 0.0
    %2421 = vmatprep.subr.mxu0 0.0
    %2422 = vmatpush1.msra.mxu0 0.0
    %2423 = vmatprep.subr.mxu0 0.0
    %2424 = vmatpush1.msra.mxu0 0.0
    %2425 = vmatprep.subr.mxu0 0.0
    %2426 = vmatpush1.msra.mxu0 0.0
    %2427 = vmatprep.subr.mxu0 0.0
    %2428 = vmatpush1.msra.mxu0 0.0
    %2429 = vmatprep.subr.mxu0 0.0
    %2430 = vmatpush1.msra.mxu0 0.0
    %2431 = vmatprep.subr.mxu0 0.0
    %2432 = vmatpush1.msra.mxu0 0.0
    %2433 = vmatprep.subr.mxu0 0.0
    %2434 = vmatpush1.msra.mxu0 0.0
    %2435 = vmatprep.subr.mxu0 0.0
    %2436 = vmatpush1.msra.mxu0 0.0
    %2437 = vmatprep.subr.mxu0 0.0
    %2438 = vmatpush1.msra.mxu0 0.0
    %2439 = vmatprep.subr.mxu0 0.0
    %2440 = vmatpush1.msra.mxu0 0.0
    %2441 = vmatprep.subr.mxu0 0.0
    %2442 = vmatpush1.msra.mxu0 0.0
    %2443 = vmatprep.subr.mxu0 0.0
    %2444 = vmatpush1.msra.mxu0 0.0
    %2445 = vmatprep.subr.mxu0 0.0
    %2446 = vmatpush1.msra.mxu0 0.0
    %2447 = vmatprep.mubr.f32.mxu0 0.0
    %2448 = vmatmul.mubr.f32.gmra.mrb[0].mxu0 %v2372
    %v2449 = vpop.f32.mrb[0].mxu0
    %v2450 = vadd.f32 %v2370, %v2449
    %v2451 = vpop.f32.mrb[0].mxu0
    %2452 = vmatprep.mubr.f32.mxu0 0.0
    %2453 = vmatmul.mubr.f32.gmra.mrb[0].mxu0 %v2375
    %v2454 = vpop.f32.mrb[0].mxu0
    %v2455 = vadd.f32 %v2370, %v2454
    %v2456 = vpop.f32.mrb[0].mxu0
    %2457 = vmatprep.mubr.f32.mxu0 0.0
    %2458 = vmatmul.mubr.f32.gmra.mrb[0].mxu0 %v2378
    %v2459 = vpop.f32.mrb[0].mxu0
    %v2460 = vadd.f32 %v2370, %v2459
    %v2461 = vpop.f32.mrb[0].mxu0
    %2462 = vmatprep.mubr.f32.mxu0 0.0
    %2463 = vmatmul.mubr.f32.gmra.mrb[0].mxu0 %v2381
    %v2464 = vpop.f32.mrb[0].mxu0
    %v2465 = vadd.f32 %v2370, %v2464
    %v2466 = vpop.f32.mrb[0].mxu0
    %2467 = vdwg.mxu0
    %v2468 = vadd.f32 %v2211, %v2450
    %v2469 = vadd.f32 %v2212, %v2455
    %v2470 = vadd.f32 %v2213, %v2460
    %v2471 = vadd.f32 %v2214, %v2465
    %v2472 = vld [vmem:[%s5 + $0x11] sm:$0x1]
    %v2473 = vld [vmem:[%s5 + $0x12] sm:$0x1]
    %v2474 = vsel %vm205, %v2468, 0.0
    %2475 = vadd.xlane.f32.xlu0 %v2474
    %v2476 = vpop.xlane.xlu0 %2475
    %v2477 = vsel %vm205, %v2469, 0.0
    %2478 = vadd.xlane.f32.xlu0 %v2477
    %v2479 = vpop.xlane.xlu0 %2478
    %v2480 = vsel %vm205, %v2470, 0.0
    %2481 = vadd.xlane.f32.xlu0 %v2480
    %v2482 = vpop.xlane.xlu0 %2481
    %v2483 = vsel %vm205, %v2471, 0.0
    %2484 = vadd.xlane.f32.xlu0 %v2483
    %v2485 = vpop.xlane.xlu0 %2484
    %v2486 = vmul.f32 %v2476, %v218
    %v2487 = vmul.f32 %v2479, %v218
    %v2488 = vmul.f32 %v2482, %v218
    %v2489 = vmul.f32 %v2485, %v218
    %v2490 = vsub.f32 %v2468, %v2486
    %v2491 = vsub.f32 %v2469, %v2487
    %v2492 = vsub.f32 %v2470, %v2488
    %v2493 = vsub.f32 %v2471, %v2489
    %v2494 = vmul.f32 %v2490, %v2490
    %v2495 = vmul.f32 %v2491, %v2491
    %v2496 = vmul.f32 %v2492, %v2492
    %v2497 = vmul.f32 %v2493, %v2493
    %v2498 = vsel %vm205, %v2494, 0.0
    %2499 = vadd.xlane.f32.xlu0 %v2498
    %v2500 = vpop.xlane.xlu0 %2499
    %v2501 = vsel %vm205, %v2495, 0.0
    %2502 = vadd.xlane.f32.xlu0 %v2501
    %v2503 = vpop.xlane.xlu0 %2502
    %v2504 = vsel %vm205, %v2496, 0.0
    %2505 = vadd.xlane.f32.xlu0 %v2504
    %v2506 = vpop.xlane.xlu0 %2505
    %v2507 = vsel %vm205, %v2497, 0.0
    %2508 = vadd.xlane.f32.xlu0 %v2507
    %v2509 = vpop.xlane.xlu0 %2508
    %v2510 = vmul.f32 %v2500, %v218
    %v2511 = vmul.f32 %v2503, %v218
    %v2512 = vmul.f32 %v2506, %v218
    %v2513 = vmul.f32 %v2509, %v218
    %v2514 = vadd.f32 %v2510, 1e-05
    %v2515 = vadd.f32 %v2511, 1e-05
    %v2516 = vadd.f32 %v2512, 1e-05
    %v2517 = vadd.f32 %v2513, 1e-05
    %v2518 = vrsqrt.pop %v2514
    %v2519 = vrsqrt.pop %v2515
    %v2520 = vrsqrt.pop %v2516
    %v2521 = vrsqrt.pop %v2517
    %v2522 = vmul.f32 %v2490, %v2518
    %v2523 = vmul.f32 %v2491, %v2519
    %v2524 = vmul.f32 %v2492, %v2520
    %v2525 = vmul.f32 %v2493, %v2521
    %v2526 = vlaneseq
    %v2527 = vshrl.u32 %v2526, 7
    %v2528 = vsub.s32 0, %v2527
    %v2529 = vrot.slane %v2472, %v2528
    %v2530 = vmul.f32 %v2522, %v2529
    %v2531 = vmul.f32 %v2523, %v2529
    %v2532 = vmul.f32 %v2524, %v2529
    %v2533 = vmul.f32 %v2525, %v2529
    %v2534 = vlaneseq
    %v2535 = vshrl.u32 %v2534, 7
    %v2536 = vsub.s32 0, %v2535
    %v2537 = vrot.slane %v2473, %v2536
    %v2538 = vadd.f32 %v2530, %v2537
    %v2539 = vadd.f32 %v2531, %v2537
    %v2540 = vadd.f32 %v2532, %v2537
    %v2541 = vadd.f32 %v2533, %v2537
    %2542 = vst.msk [vmem:[#allocation2] sm:$0xff] %vm205, %v2538
    %2543 = vst.msk [vmem:[#allocation2 + $0x8] sm:$0xff] %vm205, %v2539
    %2544 = vst.msk [vmem:[#allocation2 + $0x10] sm:$0xff] %vm205, %v2540
    %2545 = vst.msk [vmem:[#allocation2 + $0x18] sm:$0xff] %vm205, %v2541
    // Predicated region
    $region38: #{tpu_custom_call.1} parent=1 // pred_check
      _
    $region39: #{tpu_custom_call.1} parent=1 // pred_check_branch
      %2547 = sbr.rel (0) target = $region41
    $region40: #{tpu_custom_call.1} parent=1 // pred_region
      %s2549 = ssub.s32 512, 512
      %2550 = vsyncadd [#allocation3], %s2549
      %s2551 = sshll.u32 [#allocation2], 4
      %s2552 = int_to_ptr.vmem [resolvable:$true] %s2551
      %2557 = dma.vmem_to_hbm [thread:$0]  %s2552, 512, %s9, [#allocation3], 128, 128, 8
    $region41: #{tpu_custom_call.1} parent=1 // pred_fallthru
      _
    // Predicated region
    $region42: #{tpu_custom_call.1} parent=1 // pred_check
      _
    $region43: #{tpu_custom_call.1} parent=1 // pred_check_branch
      %2559 = sbr.rel (0) target = $region45
    $region44: #{tpu_custom_call.1} parent=1 // pred_region
      %2560 = dma.done [#allocation3], 512
    $region45: #{tpu_custom_call.1} parent=1 // pred_fallthru
      _
    %2561 = vsyncpa [#allocation3], 1

</llo_original>
